<compile_context>
chip_gen: v6e
topology: v6e:2x2x1
jax: 0.10.0
libtpu: 0.0.40
codegen_flags: <defaults>
</compile_context>

<pallas_src>
import math
from functools import partial

import jax
import jax.numpy as jnp
from jax.experimental import pallas as pl
from jax.experimental.pallas import tpu as pltpu

EPS = 1e-5   # nn.TransformerEncoderLayer / nn.LayerNorm default
LANE = 128   # TPU lane width — packing alignment unit


def _ceil_to(n, m=LANE):
    return ((n + m - 1) // m) * m


def _pack_cols(segments):
    """Concat 2-D (1|E|H, n) arrays along axis=1, padding each to a lane multiple.

    Returns (packed, {name: lane-aligned offset}, total_width)."""
    offs, cols, cur = {}, [], 0
    for name, a in segments:
        offs[name] = cur
        pad = _ceil_to(a.shape[1]) - a.shape[1]
        if pad:
            a = jnp.pad(a, ((0, 0), (0, pad)))
        cols.append(a)
        cur += a.shape[1]
    return jnp.concatenate(cols, axis=1), offs, cur


def _layernorm(x, g, b, eps=EPS):
    mu = jnp.mean(x, axis=-1, keepdims=True)
    var = jnp.mean((x - mu) ** 2, axis=-1, keepdims=True)  # biased var (PyTorch LayerNorm)
    return (x - mu) * jax.lax.rsqrt(var + eps) * g + b


def gps_kernel(x_ref, w_ref, w2_ref, vec_ref, o_ref, *,
               B, S, E, H, src_scale,
               wl_stride, w_offs, vl_stride, vec_offs, fvec_off, fvec_offs):
    # src * sqrt(embed_size) folded in here (src already f32 — no cast needed).
    x = x_ref[...] * src_scale                      # (B, S, E)
    x = x.reshape(B * S, E)                         # one slab for all projections

    def encoder_layer(x, l):
        # --- lane-aligned static ref slices of the packed parameter slabs (free views) ---
        wb = l * wl_stride
        wqkv = w_ref[:, wb + w_offs["wqkv"]: wb + w_offs["wqkv"] + 3 * E]   # (E, 3E) bf16
        wo   = w_ref[:, wb + w_offs["wo"]:   wb + w_offs["wo"] + E]         # (E, E)
        w1   = w_ref[:, wb + w_offs["w1"]:   wb + w_offs["w1"] + H]         # (E, H)
        w2   = w2_ref[:, l * E:(l + 1) * E]                                  # (H, E)

        vb = l * vl_stride

        def seg(name, n):
            off = vb + vec_offs[name]
            return vec_ref[:, off:off + n]

        bqkv = seg("bqkv", 3 * E)
        bo, g1, be1 = seg("bo", E), seg("g1", E), seg("be1", E)
        b1 = seg("b1", H)
        b2, g2, be2 = seg("b2", E), seg("g2", E), seg("be2", E)

        # --- self attention (single head); head_scale pre-folded into Q weight/bias ---
        qkv = jnp.dot(x.astype(jnp.bfloat16), wqkv,
                      preferred_element_type=jnp.float32) + bqkv            # (B*S, 3E)
        q = qkv[:, 0:E].reshape(B, S, E).astype(jnp.bfloat16)
        k = qkv[:, E:2 * E].reshape(B, S, E).astype(jnp.bfloat16)
        v = qkv[:, 2 * E:3 * E].reshape(B, S, E).astype(jnp.bfloat16)

        s = jnp.einsum('bqd,bkd->bqk', q, k,
                       preferred_element_type=jnp.float32)                  # (B, S, S)
        s = s - jnp.max(s, axis=-1, keepdims=True)
        p = jnp.exp(s)
        p = p * pl.reciprocal(jnp.sum(p, axis=-1, keepdims=True), approx=True)
        attn = jnp.einsum('bqk,bkd->bqd', p.astype(jnp.bfloat16), v,
                          preferred_element_type=jnp.float32)                # (B, S, E)
        attn = jnp.dot(attn.reshape(B * S, E).astype(jnp.bfloat16), wo,
                       preferred_element_type=jnp.float32) + bo

        # TODO(synk): dropout(p=0.1) is identity in eval mode; not implemented (inference kernel).
        h = _layernorm(x + attn, g1, be1)                                    # post-norm

        # --- feed forward (relu) ---
        ff = jnp.dot(h.astype(jnp.bfloat16), w1, preferred_element_type=jnp.float32) + b1
        ff = jnp.maximum(ff, 0.0)
        ff = jnp.dot(ff.astype(jnp.bfloat16), w2, preferred_element_type=jnp.float32) + b2
        return _layernorm(h + ff, g2, be2)

    x = encoder_layer(x, 0)
    x = encoder_layer(x, 1)

    # mean over the sequence axis, then final LayerNorm
    m = jnp.mean(x.reshape(B, S, E), axis=1)                                 # (B, E)
    gf = vec_ref[:, fvec_off + fvec_offs["gf"]: fvec_off + fvec_offs["gf"] + E]
    bf = vec_ref[:, fvec_off + fvec_offs["bf"]: fvec_off + fvec_offs["bf"] + E]
    o_ref[...] = _layernorm(m, gf, bf)


def gps_encoder_forward(src, params, *, embed_size, nhid):
    B, S, E = src.shape
    H = nhid
    BS = B * S

    # accurate cost hint for the surrounding XLA schedule (launch-bound kernel)
    flops_layer = (2 * BS * E * 3 * E          # fused QKV projection
                   + 2 * B * S * S * E * 2     # QK^T and PV
                   + 2 * BS * E * E            # output projection
                   + 2 * BS * E * H            # FFN up
                   + 2 * BS * H * E)           # FFN down
    flops = 2 * flops_layer
    transcendentals = 2 * (B * S * S + BS + 2 * BS) + B   # exp, recip, rsqrt per layer + final
    bytes_accessed = (src.size * 4 + params["w_slab"].size * 2
                      + params["w2_slab"].size * 2 + params["vec_slab"].size * 4 + B * E * 4)

    kernel = partial(
        gps_kernel, B=B, S=S, E=E, H=H,
        src_scale=float(math.sqrt(embed_size)),
        wl_stride=params["wl_stride"], w_offs=params["w_offs"],
        vl_stride=params["vl_stride"], vec_offs=params["vec_offs"],
        fvec_off=params["fvec_off"], fvec_offs=params["fvec_offs"])

    def vmem_spec():
        return pl.BlockSpec(memory_space=pltpu.MemorySpace.VMEM)

    # No grid: whole arrays land in VMEM, no pipelining / double-buffering machinery.
    return pl.pallas_call(
        kernel,
        out_shape=jax.ShapeDtypeStruct((B, E), jnp.float32),
        in_specs=[vmem_spec(), vmem_spec(), vmem_spec(), vmem_spec()],
        out_specs=vmem_spec(),
        cost_estimate=pl.CostEstimate(flops=flops,
                                      transcendentals=transcendentals,
                                      bytes_accessed=bytes_accessed),
    )(src, params["w_slab"], params["w2_slab"], params["vec_slab"])


def init_params(key, embed_size=128, nhid=256, nlayers=2):
    """Build random parameters and pack them offline into 3 lane-aligned slabs."""
    E, H = embed_size, nhid
    head_scale = 1.0 / math.sqrt(E)   # nhead=1 -> head_dim == E

    def nrm(k, shape, s=0.02):
        return jax.random.normal(k, shape, jnp.float32) * s

    w_slabs, w2_cols, vec_slabs = [], [], []
    w_offs = vec_offs = None
    wl_stride = vl_stride = None
    for _ in range(nlayers):
        key, *ks = jax.random.split(key, 13)
        wq, wk, wv = nrm(ks[0], (E, E)), nrm(ks[1], (E, E)), nrm(ks[2], (E, E))
        bq, bk, bv = nrm(ks[3], (1, E)), nrm(ks[4], (1, E)), nrm(ks[5], (1, E))
        wo, bo = nrm(ks[6], (E, E)), nrm(ks[7], (1, E))
        w1, b1 = nrm(ks[8], (E, H)), nrm(ks[9], (1, H))
        w2, b2 = nrm(ks[10], (H, E)), nrm(ks[11], (1, E))
        g1, be1 = jnp.ones((1, E), jnp.float32), jnp.zeros((1, E), jnp.float32)
        g2, be2 = jnp.ones((1, E), jnp.float32), jnp.zeros((1, E), jnp.float32)

        # fold 1/sqrt(head_dim) into Q projection (weight + bias) offline
        wqkv = jnp.concatenate([wq * head_scale, wk, wv], axis=1)            # (E, 3E)
        bqkv = jnp.concatenate([bq * head_scale, bk, bv], axis=1)            # (1, 3E)

        # per-layer weight slab: all matrices with K = E (pre-transposed to (in, out))
        slab, offs, stride = _pack_cols([("wqkv", wqkv.astype(jnp.bfloat16)),
                                         ("wo", wo.astype(jnp.bfloat16)),
                                         ("w1", w1.astype(jnp.bfloat16))])
        w_slabs.append(slab)
        w_offs, wl_stride = offs, stride

        w2_cols.append(w2.astype(jnp.bfloat16))                              # (H, E)

        vslab, voffs, vstride = _pack_cols([("bqkv", bqkv), ("bo", bo),
                                            ("g1", g1), ("be1", be1),
                                            ("b1", b1), ("b2", b2),
                                            ("g2", g2), ("be2", be2)])
        vec_slabs.append(vslab)
        vec_offs, vl_stride = voffs, vstride

    fvec, fvec_offs, _ = _pack_cols([("gf", jnp.ones((1, E), jnp.float32)),
                                     ("bf", jnp.zeros((1, E), jnp.float32))])
    fvec_off = nlayers * vl_stride

    return {
        "w_slab": jnp.concatenate(w_slabs, axis=1),        # (E, nlayers*wl_stride) bf16
        "w2_slab": jnp.concatenate(w2_cols, axis=1),       # (H, nlayers*E)         bf16
        "vec_slab": jnp.concatenate(vec_slabs + [fvec], axis=1),  # (1, nlayers*vl_stride + 2E) f32
        "wl_stride": wl_stride, "w_offs": w_offs,
        "vl_stride": vl_stride, "vec_offs": vec_offs,
        "fvec_off": fvec_off, "fvec_offs": fvec_offs,
    }


if __name__ == "__main__":
    EMBED, NHID, NLAYERS = 128, 256, 2   # module defaults
    B, S = 2, 8                          # small batch / sequence

    key = jax.random.PRNGKey(0)
    kx, kp = jax.random.split(key)
    src = jax.random.normal(kx, (B, S, EMBED), jnp.float32)

    params = init_params(kp, EMBED, NHID, NLAYERS)

    out = gps_encoder_forward(src, params, embed_size=EMBED, nhid=NHID)
    out = jax.block_until_ready(out)
    assert out.shape == (B, EMBED)
    assert bool(jnp.all(jnp.isfinite(out)))
    print("KERNEL_OK")
</pallas_src>

<mosaic_0001>
module attributes {stable_mosaic.version = 11 : i64} {
  func.func @gps_kernel(%arg0: memref<2x8x128xf32, #tpu.memory_space<vmem>>, %arg1: memref<128x1536xbf16, #tpu.memory_space<vmem>>, %arg2: memref<256x256xbf16, #tpu.memory_space<vmem>>, %arg3: memref<1x3072xf32, #tpu.memory_space<vmem>>, %arg4: memref<2x128xf32, #tpu.memory_space<vmem>>) attributes {dimension_semantics = [], scalar_prefetch = 0 : i64, scratch_operands = 0 : i64, tpu.core_type = #tpu.core_type<tc>} {
    %c0 = arith.constant 0 : index
    %c0_0 = arith.constant 0 : index
    %c0_1 = arith.constant 0 : index
    %0 = vector.load %arg0[%c0, %c0_0, %c0_1] : memref<2x8x128xf32, #tpu.memory_space<vmem>>, vector<2x8x128xf32>
    %cst = arith.constant 11.3137083 : f32
    %1 = vector.broadcast %cst : f32 to vector<2x8x128xf32>
    %2 = arith.mulf %0, %1 : vector<2x8x128xf32>
    %3 = vector.shape_cast %2 : vector<2x8x128xf32> to vector<16x128xf32>
    %c0_2 = arith.constant 0 : index
    %c0_3 = arith.constant 0 : index
    %4 = vector.load %arg1[%c0_2, %c0_3] : memref<128x1536xbf16, #tpu.memory_space<vmem>>, vector<128x384xbf16>
    %c0_4 = arith.constant 0 : index
    %c384 = arith.constant 384 : index
    %5 = vector.load %arg1[%c0_4, %c384] : memref<128x1536xbf16, #tpu.memory_space<vmem>>, vector<128x128xbf16>
    %c0_5 = arith.constant 0 : index
    %c512 = arith.constant 512 : index
    %6 = vector.load %arg1[%c0_5, %c512] : memref<128x1536xbf16, #tpu.memory_space<vmem>>, vector<128x256xbf16>
    %c0_6 = arith.constant 0 : index
    %c0_7 = arith.constant 0 : index
    %7 = vector.load %arg2[%c0_6, %c0_7] : memref<256x256xbf16, #tpu.memory_space<vmem>>, vector<256x128xbf16>
    %c0_8 = arith.constant 0 : index
    %c0_9 = arith.constant 0 : index
    %8 = vector.load %arg3[%c0_8, %c0_9] : memref<1x3072xf32, #tpu.memory_space<vmem>>, vector<1x384xf32>
    %c0_10 = arith.constant 0 : index
    %c384_11 = arith.constant 384 : index
    %9 = vector.load %arg3[%c0_10, %c384_11] : memref<1x3072xf32, #tpu.memory_space<vmem>>, vector<1x128xf32>
    %c0_12 = arith.constant 0 : index
    %c512_13 = arith.constant 512 : index
    %10 = vector.load %arg3[%c0_12, %c512_13] : memref<1x3072xf32, #tpu.memory_space<vmem>>, vector<1x128xf32>
    %c0_14 = arith.constant 0 : index
    %c640 = arith.constant 640 : index
    %11 = vector.load %arg3[%c0_14, %c640] : memref<1x3072xf32, #tpu.memory_space<vmem>>, vector<1x128xf32>
    %c0_15 = arith.constant 0 : index
    %c768 = arith.constant 768 : index
    %12 = vector.load %arg3[%c0_15, %c768] : memref<1x3072xf32, #tpu.memory_space<vmem>>, vector<1x256xf32>
    %c0_16 = arith.constant 0 : index
    %c1024 = arith.constant 1024 : index
    %13 = vector.load %arg3[%c0_16, %c1024] : memref<1x3072xf32, #tpu.memory_space<vmem>>, vector<1x128xf32>
    %c0_17 = arith.constant 0 : index
    %c1152 = arith.constant 1152 : index
    %14 = vector.load %arg3[%c0_17, %c1152] : memref<1x3072xf32, #tpu.memory_space<vmem>>, vector<1x128xf32>
    %c0_18 = arith.constant 0 : index
    %c1280 = arith.constant 1280 : index
    %15 = vector.load %arg3[%c0_18, %c1280] : memref<1x3072xf32, #tpu.memory_space<vmem>>, vector<1x128xf32>
    %16 = arith.truncf %3 : vector<16x128xf32> to vector<16x128xbf16>
    %cst_19 = arith.constant dense<0.000000e+00> : vector<16x384xf32>
    %17 = tpu.matmul %16, %4, %cst_19 {dimension_numbers = #tpu.dot_dimension_numbers<[1], [0], [0], [1], [0, 0, 1, 1], [], []>} : vector<16x128xbf16>, vector<128x384xbf16>, vector<16x384xf32> -> vector<16x384xf32>
    %18 = vector.broadcast %8 : vector<1x384xf32> to vector<16x384xf32>
    %19 = arith.addf %17, %18 : vector<16x384xf32>
    %20 = vector.extract_strided_slice %19 {offsets = [0, 0], sizes = [16, 128], strides = [1, 1]} : vector<16x384xf32> to vector<16x128xf32>
    %21 = vector.shape_cast %20 : vector<16x128xf32> to vector<2x8x128xf32>
    %22 = arith.truncf %21 : vector<2x8x128xf32> to vector<2x8x128xbf16>
    %23 = vector.extract_strided_slice %19 {offsets = [0, 128], sizes = [16, 128], strides = [1, 1]} : vector<16x384xf32> to vector<16x128xf32>
    %24 = vector.shape_cast %23 : vector<16x128xf32> to vector<2x8x128xf32>
    %25 = arith.truncf %24 : vector<2x8x128xf32> to vector<2x8x128xbf16>
    %26 = vector.extract_strided_slice %19 {offsets = [0, 256], sizes = [16, 128], strides = [1, 1]} : vector<16x384xf32> to vector<16x128xf32>
    %27 = vector.shape_cast %26 : vector<16x128xf32> to vector<2x8x128xf32>
    %28 = arith.truncf %27 : vector<2x8x128xf32> to vector<2x8x128xbf16>
    "tpu.trace_start"() <{level = 10 : i32, message = "bqd,bkd->bqk"}> : () -> ()
    %cst_20 = arith.constant dense<0.000000e+00> : vector<2x8x8xf32>
    %29 = tpu.matmul %22, %25, %cst_20 {dimension_numbers = #tpu.dot_dimension_numbers<[2], [2], [1], [1], [0, 0, 0, 1, 1, 1], [0], [0]>} : vector<2x8x128xbf16>, vector<2x8x128xbf16>, vector<2x8x8xf32> -> vector<2x8x8xf32>
    "tpu.trace_stop"() : () -> ()
    %cst_21 = arith.constant dense<0xFF800000> : vector<2x8xf32>
    %30 = vector.multi_reduction <maximumf>, %29, %cst_21 [2] : vector<2x8x8xf32> to vector<2x8xf32>
    %31 = vector.shape_cast %30 : vector<2x8xf32> to vector<2x8x1xf32>
    %32 = vector.broadcast %31 : vector<2x8x1xf32> to vector<2x8x8xf32>
    %33 = arith.subf %29, %32 : vector<2x8x8xf32>
    %34 = math.exp %33 : vector<2x8x8xf32>
    %cst_22 = arith.constant dense<0.000000e+00> : vector<2x8xf32>
    %35 = vector.multi_reduction <add>, %34, %cst_22 [2] : vector<2x8x8xf32> to vector<2x8xf32>
    %36 = vector.shape_cast %35 : vector<2x8xf32> to vector<2x8x1xf32>
    %37 = tpu.reciprocal %36 {approx = true} : vector<2x8x1xf32> -> vector<2x8x1xf32>
    %38 = vector.broadcast %37 : vector<2x8x1xf32> to vector<2x8x8xf32>
    %39 = arith.mulf %34, %38 : vector<2x8x8xf32>
    %40 = arith.truncf %39 : vector<2x8x8xf32> to vector<2x8x8xbf16>
    "tpu.trace_start"() <{level = 10 : i32, message = "bqk,bkd->bqd"}> : () -> ()
    %cst_23 = arith.constant dense<0.000000e+00> : vector<2x8x128xf32>
    %41 = tpu.matmul %40, %28, %cst_23 {dimension_numbers = #tpu.dot_dimension_numbers<[2], [1], [1], [2], [0, 0, 0, 1, 1, 2], [0], [0]>} : vector<2x8x8xbf16>, vector<2x8x128xbf16>, vector<2x8x128xf32> -> vector<2x8x128xf32>
    "tpu.trace_stop"() : () -> ()
    %42 = vector.shape_cast %41 : vector<2x8x128xf32> to vector<16x128xf32>
    %43 = arith.truncf %42 : vector<16x128xf32> to vector<16x128xbf16>
    %cst_24 = arith.constant dense<0.000000e+00> : vector<16x128xf32>
    %44 = tpu.matmul %43, %5, %cst_24 {dimension_numbers = #tpu.dot_dimension_numbers<[1], [0], [0], [1], [0, 0, 1, 1], [], []>} : vector<16x128xbf16>, vector<128x128xbf16>, vector<16x128xf32> -> vector<16x128xf32>
    %45 = vector.broadcast %9 : vector<1x128xf32> to vector<16x128xf32>
    %46 = arith.addf %44, %45 : vector<16x128xf32>
    %47 = arith.addf %3, %46 : vector<16x128xf32>
    %cst_25 = arith.constant dense<0.000000e+00> : vector<16xf32>
    %48 = vector.multi_reduction <add>, %47, %cst_25 [1] : vector<16x128xf32> to vector<16xf32>
    %49 = vector.shape_cast %48 : vector<16xf32> to vector<16x1xf32>
    %cst_26 = arith.constant 1.280000e+02 : f32
    %50 = vector.broadcast %cst_26 : f32 to vector<16x1xf32>
    %51 = arith.divf %49, %50 : vector<16x1xf32>
    %52 = vector.broadcast %51 : vector<16x1xf32> to vector<16x128xf32>
    %53 = arith.subf %47, %52 : vector<16x128xf32>
    %54 = arith.mulf %53, %53 : vector<16x128xf32>
    %cst_27 = arith.constant dense<0.000000e+00> : vector<16xf32>
    %55 = vector.multi_reduction <add>, %54, %cst_27 [1] : vector<16x128xf32> to vector<16xf32>
    %56 = vector.shape_cast %55 : vector<16xf32> to vector<16x1xf32>
    %cst_28 = arith.constant 1.280000e+02 : f32
    %57 = vector.broadcast %cst_28 : f32 to vector<16x1xf32>
    %58 = arith.divf %56, %57 : vector<16x1xf32>
    %59 = vector.broadcast %51 : vector<16x1xf32> to vector<16x128xf32>
    %60 = arith.subf %47, %59 : vector<16x128xf32>
    %cst_29 = arith.constant 9.99999974E-6 : f32
    %61 = vector.broadcast %cst_29 : f32 to vector<16x1xf32>
    %62 = arith.addf %58, %61 : vector<16x1xf32>
    %63 = math.rsqrt %62 : vector<16x1xf32>
    %64 = vector.broadcast %63 : vector<16x1xf32> to vector<16x128xf32>
    %65 = arith.mulf %60, %64 : vector<16x128xf32>
    %66 = vector.broadcast %10 : vector<1x128xf32> to vector<16x128xf32>
    %67 = arith.mulf %65, %66 : vector<16x128xf32>
    %68 = vector.broadcast %11 : vector<1x128xf32> to vector<16x128xf32>
    %69 = arith.addf %67, %68 : vector<16x128xf32>
    %70 = arith.truncf %69 : vector<16x128xf32> to vector<16x128xbf16>
    %cst_30 = arith.constant dense<0.000000e+00> : vector<16x256xf32>
    %71 = tpu.matmul %70, %6, %cst_30 {dimension_numbers = #tpu.dot_dimension_numbers<[1], [0], [0], [1], [0, 0, 1, 1], [], []>} : vector<16x128xbf16>, vector<128x256xbf16>, vector<16x256xf32> -> vector<16x256xf32>
    %72 = vector.broadcast %12 : vector<1x256xf32> to vector<16x256xf32>
    %73 = arith.addf %71, %72 : vector<16x256xf32>
    %cst_31 = arith.constant 0.000000e+00 : f32
    %74 = vector.broadcast %cst_31 : f32 to vector<16x256xf32>
    %75 = arith.maximumf %73, %74 : vector<16x256xf32>
    %76 = arith.truncf %75 : vector<16x256xf32> to vector<16x256xbf16>
    %cst_32 = arith.constant dense<0.000000e+00> : vector<16x128xf32>
    %77 = tpu.matmul %76, %7, %cst_32 {dimension_numbers = #tpu.dot_dimension_numbers<[1], [0], [0], [1], [0, 0, 1, 1], [], []>} : vector<16x256xbf16>, vector<256x128xbf16>, vector<16x128xf32> -> vector<16x128xf32>
    %78 = vector.broadcast %13 : vector<1x128xf32> to vector<16x128xf32>
    %79 = arith.addf %77, %78 : vector<16x128xf32>
    %80 = arith.addf %69, %79 : vector<16x128xf32>
    %cst_33 = arith.constant dense<0.000000e+00> : vector<16xf32>
    %81 = vector.multi_reduction <add>, %80, %cst_33 [1] : vector<16x128xf32> to vector<16xf32>
    %82 = vector.shape_cast %81 : vector<16xf32> to vector<16x1xf32>
    %cst_34 = arith.constant 1.280000e+02 : f32
    %83 = vector.broadcast %cst_34 : f32 to vector<16x1xf32>
    %84 = arith.divf %82, %83 : vector<16x1xf32>
    %85 = vector.broadcast %84 : vector<16x1xf32> to vector<16x128xf32>
    %86 = arith.subf %80, %85 : vector<16x128xf32>
    %87 = arith.mulf %86, %86 : vector<16x128xf32>
    %cst_35 = arith.constant dense<0.000000e+00> : vector<16xf32>
    %88 = vector.multi_reduction <add>, %87, %cst_35 [1] : vector<16x128xf32> to vector<16xf32>
    %89 = vector.shape_cast %88 : vector<16xf32> to vector<16x1xf32>
    %cst_36 = arith.constant 1.280000e+02 : f32
    %90 = vector.broadcast %cst_36 : f32 to vector<16x1xf32>
    %91 = arith.divf %89, %90 : vector<16x1xf32>
    %92 = vector.broadcast %84 : vector<16x1xf32> to vector<16x128xf32>
    %93 = arith.subf %80, %92 : vector<16x128xf32>
    %cst_37 = arith.constant 9.99999974E-6 : f32
    %94 = vector.broadcast %cst_37 : f32 to vector<16x1xf32>
    %95 = arith.addf %91, %94 : vector<16x1xf32>
    %96 = math.rsqrt %95 : vector<16x1xf32>
    %97 = vector.broadcast %96 : vector<16x1xf32> to vector<16x128xf32>
    %98 = arith.mulf %93, %97 : vector<16x128xf32>
    %99 = vector.broadcast %14 : vector<1x128xf32> to vector<16x128xf32>
    %100 = arith.mulf %98, %99 : vector<16x128xf32>
    %101 = vector.broadcast %15 : vector<1x128xf32> to vector<16x128xf32>
    %102 = arith.addf %100, %101 : vector<16x128xf32>
    %c0_38 = arith.constant 0 : index
    %c768_39 = arith.constant 768 : index
    %103 = vector.load %arg1[%c0_38, %c768_39] : memref<128x1536xbf16, #tpu.memory_space<vmem>>, vector<128x384xbf16>
    %c0_40 = arith.constant 0 : index
    %c1152_41 = arith.constant 1152 : index
    %104 = vector.load %arg1[%c0_40, %c1152_41] : memref<128x1536xbf16, #tpu.memory_space<vmem>>, vector<128x128xbf16>
    %c0_42 = arith.constant 0 : index
    %c1280_43 = arith.constant 1280 : index
    %105 = vector.load %arg1[%c0_42, %c1280_43] : memref<128x1536xbf16, #tpu.memory_space<vmem>>, vector<128x256xbf16>
    %c0_44 = arith.constant 0 : index
    %c128 = arith.constant 128 : index
    %106 = vector.load %arg2[%c0_44, %c128] : memref<256x256xbf16, #tpu.memory_space<vmem>>, vector<256x128xbf16>
    %c0_45 = arith.constant 0 : index
    %c1408 = arith.constant 1408 : index
    %107 = vector.load %arg3[%c0_45, %c1408] : memref<1x3072xf32, #tpu.memory_space<vmem>>, vector<1x384xf32>
    %c0_46 = arith.constant 0 : index
    %c1792 = arith.constant 1792 : index
    %108 = vector.load %arg3[%c0_46, %c1792] : memref<1x3072xf32, #tpu.memory_space<vmem>>, vector<1x128xf32>
    %c0_47 = arith.constant 0 : index
    %c1920 = arith.constant 1920 : index
    %109 = vector.load %arg3[%c0_47, %c1920] : memref<1x3072xf32, #tpu.memory_space<vmem>>, vector<1x128xf32>
    %c0_48 = arith.constant 0 : index
    %c2048 = arith.constant 2048 : index
    %110 = vector.load %arg3[%c0_48, %c2048] : memref<1x3072xf32, #tpu.memory_space<vmem>>, vector<1x128xf32>
    %c0_49 = arith.constant 0 : index
    %c2176 = arith.constant 2176 : index
    %111 = vector.load %arg3[%c0_49, %c2176] : memref<1x3072xf32, #tpu.memory_space<vmem>>, vector<1x256xf32>
    %c0_50 = arith.constant 0 : index
    %c2432 = arith.constant 2432 : index
    %112 = vector.load %arg3[%c0_50, %c2432] : memref<1x3072xf32, #tpu.memory_space<vmem>>, vector<1x128xf32>
    %c0_51 = arith.constant 0 : index
    %c2560 = arith.constant 2560 : index
    %113 = vector.load %arg3[%c0_51, %c2560] : memref<1x3072xf32, #tpu.memory_space<vmem>>, vector<1x128xf32>
    %c0_52 = arith.constant 0 : index
    %c2688 = arith.constant 2688 : index
    %114 = vector.load %arg3[%c0_52, %c2688] : memref<1x3072xf32, #tpu.memory_space<vmem>>, vector<1x128xf32>
    %115 = arith.truncf %102 : vector<16x128xf32> to vector<16x128xbf16>
    %cst_53 = arith.constant dense<0.000000e+00> : vector<16x384xf32>
    %116 = tpu.matmul %115, %103, %cst_53 {dimension_numbers = #tpu.dot_dimension_numbers<[1], [0], [0], [1], [0, 0, 1, 1], [], []>} : vector<16x128xbf16>, vector<128x384xbf16>, vector<16x384xf32> -> vector<16x384xf32>
    %117 = vector.broadcast %107 : vector<1x384xf32> to vector<16x384xf32>
    %118 = arith.addf %116, %117 : vector<16x384xf32>
    %119 = vector.extract_strided_slice %118 {offsets = [0, 0], sizes = [16, 128], strides = [1, 1]} : vector<16x384xf32> to vector<16x128xf32>
    %120 = vector.shape_cast %119 : vector<16x128xf32> to vector<2x8x128xf32>
    %121 = arith.truncf %120 : vector<2x8x128xf32> to vector<2x8x128xbf16>
    %122 = vector.extract_strided_slice %118 {offsets = [0, 128], sizes = [16, 128], strides = [1, 1]} : vector<16x384xf32> to vector<16x128xf32>
    %123 = vector.shape_cast %122 : vector<16x128xf32> to vector<2x8x128xf32>
    %124 = arith.truncf %123 : vector<2x8x128xf32> to vector<2x8x128xbf16>
    %125 = vector.extract_strided_slice %118 {offsets = [0, 256], sizes = [16, 128], strides = [1, 1]} : vector<16x384xf32> to vector<16x128xf32>
    %126 = vector.shape_cast %125 : vector<16x128xf32> to vector<2x8x128xf32>
    %127 = arith.truncf %126 : vector<2x8x128xf32> to vector<2x8x128xbf16>
    "tpu.trace_start"() <{level = 10 : i32, message = "bqd,bkd->bqk"}> : () -> ()
    %cst_54 = arith.constant dense<0.000000e+00> : vector<2x8x8xf32>
    %128 = tpu.matmul %121, %124, %cst_54 {dimension_numbers = #tpu.dot_dimension_numbers<[2], [2], [1], [1], [0, 0, 0, 1, 1, 1], [0], [0]>} : vector<2x8x128xbf16>, vector<2x8x128xbf16>, vector<2x8x8xf32> -> vector<2x8x8xf32>
    "tpu.trace_stop"() : () -> ()
    %cst_55 = arith.constant dense<0xFF800000> : vector<2x8xf32>
    %129 = vector.multi_reduction <maximumf>, %128, %cst_55 [2] : vector<2x8x8xf32> to vector<2x8xf32>
    %130 = vector.shape_cast %129 : vector<2x8xf32> to vector<2x8x1xf32>
    %131 = vector.broadcast %130 : vector<2x8x1xf32> to vector<2x8x8xf32>
    %132 = arith.subf %128, %131 : vector<2x8x8xf32>
    %133 = math.exp %132 : vector<2x8x8xf32>
    %cst_56 = arith.constant dense<0.000000e+00> : vector<2x8xf32>
    %134 = vector.multi_reduction <add>, %133, %cst_56 [2] : vector<2x8x8xf32> to vector<2x8xf32>
    %135 = vector.shape_cast %134 : vector<2x8xf32> to vector<2x8x1xf32>
    %136 = tpu.reciprocal %135 {approx = true} : vector<2x8x1xf32> -> vector<2x8x1xf32>
    %137 = vector.broadcast %136 : vector<2x8x1xf32> to vector<2x8x8xf32>
    %138 = arith.mulf %133, %137 : vector<2x8x8xf32>
    %139 = arith.truncf %138 : vector<2x8x8xf32> to vector<2x8x8xbf16>
    "tpu.trace_start"() <{level = 10 : i32, message = "bqk,bkd->bqd"}> : () -> ()
    %cst_57 = arith.constant dense<0.000000e+00> : vector<2x8x128xf32>
    %140 = tpu.matmul %139, %127, %cst_57 {dimension_numbers = #tpu.dot_dimension_numbers<[2], [1], [1], [2], [0, 0, 0, 1, 1, 2], [0], [0]>} : vector<2x8x8xbf16>, vector<2x8x128xbf16>, vector<2x8x128xf32> -> vector<2x8x128xf32>
    "tpu.trace_stop"() : () -> ()
    %141 = vector.shape_cast %140 : vector<2x8x128xf32> to vector<16x128xf32>
    %142 = arith.truncf %141 : vector<16x128xf32> to vector<16x128xbf16>
    %cst_58 = arith.constant dense<0.000000e+00> : vector<16x128xf32>
    %143 = tpu.matmul %142, %104, %cst_58 {dimension_numbers = #tpu.dot_dimension_numbers<[1], [0], [0], [1], [0, 0, 1, 1], [], []>} : vector<16x128xbf16>, vector<128x128xbf16>, vector<16x128xf32> -> vector<16x128xf32>
    %144 = vector.broadcast %108 : vector<1x128xf32> to vector<16x128xf32>
    %145 = arith.addf %143, %144 : vector<16x128xf32>
    %146 = arith.addf %102, %145 : vector<16x128xf32>
    %cst_59 = arith.constant dense<0.000000e+00> : vector<16xf32>
    %147 = vector.multi_reduction <add>, %146, %cst_59 [1] : vector<16x128xf32> to vector<16xf32>
    %148 = vector.shape_cast %147 : vector<16xf32> to vector<16x1xf32>
    %cst_60 = arith.constant 1.280000e+02 : f32
    %149 = vector.broadcast %cst_60 : f32 to vector<16x1xf32>
    %150 = arith.divf %148, %149 : vector<16x1xf32>
    %151 = vector.broadcast %150 : vector<16x1xf32> to vector<16x128xf32>
    %152 = arith.subf %146, %151 : vector<16x128xf32>
    %153 = arith.mulf %152, %152 : vector<16x128xf32>
    %cst_61 = arith.constant dense<0.000000e+00> : vector<16xf32>
    %154 = vector.multi_reduction <add>, %153, %cst_61 [1] : vector<16x128xf32> to vector<16xf32>
    %155 = vector.shape_cast %154 : vector<16xf32> to vector<16x1xf32>
    %cst_62 = arith.constant 1.280000e+02 : f32
    %156 = vector.broadcast %cst_62 : f32 to vector<16x1xf32>
    %157 = arith.divf %155, %156 : vector<16x1xf32>
    %158 = vector.broadcast %150 : vector<16x1xf32> to vector<16x128xf32>
    %159 = arith.subf %146, %158 : vector<16x128xf32>
    %cst_63 = arith.constant 9.99999974E-6 : f32
    %160 = vector.broadcast %cst_63 : f32 to vector<16x1xf32>
    %161 = arith.addf %157, %160 : vector<16x1xf32>
    %162 = math.rsqrt %161 : vector<16x1xf32>
    %163 = vector.broadcast %162 : vector<16x1xf32> to vector<16x128xf32>
    %164 = arith.mulf %159, %163 : vector<16x128xf32>
    %165 = vector.broadcast %109 : vector<1x128xf32> to vector<16x128xf32>
    %166 = arith.mulf %164, %165 : vector<16x128xf32>
    %167 = vector.broadcast %110 : vector<1x128xf32> to vector<16x128xf32>
    %168 = arith.addf %166, %167 : vector<16x128xf32>
    %169 = arith.truncf %168 : vector<16x128xf32> to vector<16x128xbf16>
    %cst_64 = arith.constant dense<0.000000e+00> : vector<16x256xf32>
    %170 = tpu.matmul %169, %105, %cst_64 {dimension_numbers = #tpu.dot_dimension_numbers<[1], [0], [0], [1], [0, 0, 1, 1], [], []>} : vector<16x128xbf16>, vector<128x256xbf16>, vector<16x256xf32> -> vector<16x256xf32>
    %171 = vector.broadcast %111 : vector<1x256xf32> to vector<16x256xf32>
    %172 = arith.addf %170, %171 : vector<16x256xf32>
    %cst_65 = arith.constant 0.000000e+00 : f32
    %173 = vector.broadcast %cst_65 : f32 to vector<16x256xf32>
    %174 = arith.maximumf %172, %173 : vector<16x256xf32>
    %175 = arith.truncf %174 : vector<16x256xf32> to vector<16x256xbf16>
    %cst_66 = arith.constant dense<0.000000e+00> : vector<16x128xf32>
    %176 = tpu.matmul %175, %106, %cst_66 {dimension_numbers = #tpu.dot_dimension_numbers<[1], [0], [0], [1], [0, 0, 1, 1], [], []>} : vector<16x256xbf16>, vector<256x128xbf16>, vector<16x128xf32> -> vector<16x128xf32>
    %177 = vector.broadcast %112 : vector<1x128xf32> to vector<16x128xf32>
    %178 = arith.addf %176, %177 : vector<16x128xf32>
    %179 = arith.addf %168, %178 : vector<16x128xf32>
    %cst_67 = arith.constant dense<0.000000e+00> : vector<16xf32>
    %180 = vector.multi_reduction <add>, %179, %cst_67 [1] : vector<16x128xf32> to vector<16xf32>
    %181 = vector.shape_cast %180 : vector<16xf32> to vector<16x1xf32>
    %cst_68 = arith.constant 1.280000e+02 : f32
    %182 = vector.broadcast %cst_68 : f32 to vector<16x1xf32>
    %183 = arith.divf %181, %182 : vector<16x1xf32>
    %184 = vector.broadcast %183 : vector<16x1xf32> to vector<16x128xf32>
    %185 = arith.subf %179, %184 : vector<16x128xf32>
    %186 = arith.mulf %185, %185 : vector<16x128xf32>
    %cst_69 = arith.constant dense<0.000000e+00> : vector<16xf32>
    %187 = vector.multi_reduction <add>, %186, %cst_69 [1] : vector<16x128xf32> to vector<16xf32>
    %188 = vector.shape_cast %187 : vector<16xf32> to vector<16x1xf32>
    %cst_70 = arith.constant 1.280000e+02 : f32
    %189 = vector.broadcast %cst_70 : f32 to vector<16x1xf32>
    %190 = arith.divf %188, %189 : vector<16x1xf32>
    %191 = vector.broadcast %183 : vector<16x1xf32> to vector<16x128xf32>
    %192 = arith.subf %179, %191 : vector<16x128xf32>
    %cst_71 = arith.constant 9.99999974E-6 : f32
    %193 = vector.broadcast %cst_71 : f32 to vector<16x1xf32>
    %194 = arith.addf %190, %193 : vector<16x1xf32>
    %195 = math.rsqrt %194 : vector<16x1xf32>
    %196 = vector.broadcast %195 : vector<16x1xf32> to vector<16x128xf32>
    %197 = arith.mulf %192, %196 : vector<16x128xf32>
    %198 = vector.broadcast %113 : vector<1x128xf32> to vector<16x128xf32>
    %199 = arith.mulf %197, %198 : vector<16x128xf32>
    %200 = vector.broadcast %114 : vector<1x128xf32> to vector<16x128xf32>
    %201 = arith.addf %199, %200 : vector<16x128xf32>
    %202 = vector.shape_cast %201 : vector<16x128xf32> to vector<2x8x128xf32>
    %cst_72 = arith.constant dense<0.000000e+00> : vector<2x128xf32>
    %203 = vector.multi_reduction <add>, %202, %cst_72 [1] : vector<2x8x128xf32> to vector<2x128xf32>
    %cst_73 = arith.constant 8.000000e+00 : f32
    %204 = vector.broadcast %cst_73 : f32 to vector<2x128xf32>
    %205 = arith.divf %203, %204 : vector<2x128xf32>
    %c0_74 = arith.constant 0 : index
    %c2816 = arith.constant 2816 : index
    %206 = vector.load %arg3[%c0_74, %c2816] : memref<1x3072xf32, #tpu.memory_space<vmem>>, vector<1x128xf32>
    %c0_75 = arith.constant 0 : index
    %c2944 = arith.constant 2944 : index
    %207 = vector.load %arg3[%c0_75, %c2944] : memref<1x3072xf32, #tpu.memory_space<vmem>>, vector<1x128xf32>
    %cst_76 = arith.constant dense<0.000000e+00> : vector<2xf32>
    %208 = vector.multi_reduction <add>, %205, %cst_76 [1] : vector<2x128xf32> to vector<2xf32>
    %209 = vector.shape_cast %208 : vector<2xf32> to vector<2x1xf32>
    %cst_77 = arith.constant 1.280000e+02 : f32
    %210 = vector.broadcast %cst_77 : f32 to vector<2x1xf32>
    %211 = arith.divf %209, %210 : vector<2x1xf32>
    %212 = vector.broadcast %211 : vector<2x1xf32> to vector<2x128xf32>
    %213 = arith.subf %205, %212 : vector<2x128xf32>
    %214 = arith.mulf %213, %213 : vector<2x128xf32>
    %cst_78 = arith.constant dense<0.000000e+00> : vector<2xf32>
    %215 = vector.multi_reduction <add>, %214, %cst_78 [1] : vector<2x128xf32> to vector<2xf32>
    %216 = vector.shape_cast %215 : vector<2xf32> to vector<2x1xf32>
    %cst_79 = arith.constant 1.280000e+02 : f32
    %217 = vector.broadcast %cst_79 : f32 to vector<2x1xf32>
    %218 = arith.divf %216, %217 : vector<2x1xf32>
    %219 = vector.broadcast %211 : vector<2x1xf32> to vector<2x128xf32>
    %220 = arith.subf %205, %219 : vector<2x128xf32>
    %cst_80 = arith.constant 9.99999974E-6 : f32
    %221 = vector.broadcast %cst_80 : f32 to vector<2x1xf32>
    %222 = arith.addf %218, %221 : vector<2x1xf32>
    %223 = math.rsqrt %222 : vector<2x1xf32>
    %224 = vector.broadcast %223 : vector<2x1xf32> to vector<2x128xf32>
    %225 = arith.mulf %220, %224 : vector<2x128xf32>
    %226 = vector.broadcast %206 : vector<1x128xf32> to vector<2x128xf32>
    %227 = arith.mulf %225, %226 : vector<2x128xf32>
    %228 = vector.broadcast %207 : vector<1x128xf32> to vector<2x128xf32>
    %229 = arith.addf %227, %228 : vector<2x128xf32>
    %c0_81 = arith.constant 0 : index
    %c0_82 = arith.constant 0 : index
    %230 = vector.load %arg4[%c0_81, %c0_82] : memref<2x128xf32, #tpu.memory_space<vmem>>, vector<2x128xf32>
    tpu.vector_store %arg4[%c0_81, %c0_82], %229 {strides = array<i32>} : memref<2x128xf32, #tpu.memory_space<vmem>>, vector<2x128xf32>,
    return
  }
}

</mosaic_0001>

<llo_original>
// kernel: tpu_custom_call.1
$region0: #{tpu_custom_call.1}
  #allocation0 [shape = 'u32[]', space=smem, size = 0x4, offset = 0x4, fixed_abs, tag = 'smem constant byte address 0x4 - core index']
  #allocation1 [shape = 'u32[144,128]{1,0:T(1,128)}', space=vmem, size = 0x12000, scoped, tag = 'internal scratch']
  %s0 = inlined_call_operand.hbm [shape: f32[2,8,128], index: 0, kind: input, shape index: {}]
  %s1 = inlined_call_operand.hbm [shape: bf16[128,1536], index: 1, kind: input, shape index: {}]
  %s2 = inlined_call_operand.hbm [shape: bf16[256,256], index: 2, kind: input, shape index: {}]
  %s3 = inlined_call_operand.hbm [shape: f32[1,3072], index: 3, kind: input, shape index: {}]
  %s4 = inlined_call_operand.hbm [shape: f32[2,128], index: 4, kind: output, shape index: {}]
  %s5 = sld [smem:[#allocation0]]
  $region42: #{tpu_custom_call.1} parent=0
    _
  %s7 = ssub.s32 1, %s5
  %s8 = scalar_select 0, %s7, %s5
  $region1: #{tpu_custom_call.1} parent=0
    #allocation2 [shape = 'u8[8192]{0}', space=vmem, size = 0x2000, scoped, tag = 'input window, operand 0, single buffered']
    #allocation3 [shape = 's32[1]{0}', space=sflag, size = 0x4, scoped, tag = 'scoped memory for tpu_custom_call.1']
    #allocation4 [shape = 's32[1]{0}', space=sflag, size = 0x4, scoped, tag = 'scoped memory for tpu_custom_call.1']
    #allocation5 [shape = 'u8[393216]{0}', space=vmem, size = 0x60000, scoped, tag = 'input window, operand 1, single buffered']
    #allocation6 [shape = 's32[1]{0}', space=sflag, size = 0x4, scoped, tag = 'scoped memory for tpu_custom_call.1']
    #allocation7 [shape = 'u8[131072]{0}', space=vmem, size = 0x20000, scoped, tag = 'input window, operand 2, single buffered']
    #allocation8 [shape = 'u8[12288]{0}', space=vmem, size = 0x3000, scoped, tag = 'input window, operand 3, single buffered']
    #allocation9 [shape = 's32[1]{0}', space=sflag, size = 0x4, scoped, tag = 'scoped memory for tpu_custom_call.1']
    #allocation10 [shape = 'u8[1024]{0}', space=vmem, size = 0x400, scoped, tag = 'output window, operand 0, single buffered']
    %9 = vsyncpa [#allocation3], 0
    %10 = vsyncpa [#allocation6], 0
    %11 = vsyncpa [#allocation9], 0
    %12 = vsyncpa [#allocation4], 0
    // Predicated region
    $region2: #{tpu_custom_call.1} parent=1 // pred_check
      _
    $region3: #{tpu_custom_call.1} parent=1 // pred_check_branch
      %14 = sbr.rel (0) target = $region5
    $region4: #{tpu_custom_call.1} parent=1 // pred_region
      %s16 = ssub.s32 256, 256
      %17 = vsyncadd [#allocation3], %s16
      %s18 = sshll.u32 [#allocation2], 4
      %s19 = int_to_ptr.vmem [resolvable:$true] %s18
      %24 = dma.hbm_to_vmem [thread:$0]  %s0, 256, %s19, [#allocation3], 128, 128, 8
    $region5: #{tpu_custom_call.1} parent=1 // pred_fallthru
      _
    // Predicated region
    $region6: #{tpu_custom_call.1} parent=1 // pred_check
      _
    $region7: #{tpu_custom_call.1} parent=1 // pred_check_branch
      %26 = sbr.rel (0) target = $region9
    $region8: #{tpu_custom_call.1} parent=1 // pred_region
      %s28 = ssub.s32 12288, 12288
      %29 = vsyncadd [#allocation6], %s28
      %s30 = sshll.u32 [#allocation5], 4
      %s31 = int_to_ptr.vmem [resolvable:$true] %s30
      %36 = dma.hbm_to_vmem [thread:$0]  %s1, 12288, %s31, [#allocation6], 768, 768, 48
    $region9: #{tpu_custom_call.1} parent=1 // pred_fallthru
      _
    // Predicated region
    $region10: #{tpu_custom_call.1} parent=1 // pred_check
      _
    $region11: #{tpu_custom_call.1} parent=1 // pred_check_branch
      %38 = sbr.rel (0) target = $region13
    $region12: #{tpu_custom_call.1} parent=1 // pred_region
      %s40 = ssub.s32 4096, 4096
      %41 = vsyncadd [#allocation6], %s40
      %s42 = sshll.u32 [#allocation7], 4
      %s43 = int_to_ptr.vmem [resolvable:$true] %s42
      %48 = dma.hbm_to_vmem [thread:$0]  %s2, 4096, %s43, [#allocation6], 128, 128, 8
    $region13: #{tpu_custom_call.1} parent=1 // pred_fallthru
      _
    // Predicated region
    $region14: #{tpu_custom_call.1} parent=1 // pred_check
      _
    $region15: #{tpu_custom_call.1} parent=1 // pred_check_branch
      %50 = sbr.rel (0) target = $region17
    $region16: #{tpu_custom_call.1} parent=1 // pred_region
      %s52 = ssub.s32 384, 384
      %53 = vsyncadd [#allocation9], %s52
      %s55 = sshll.u32 [#allocation8], 4
      %s56 = int_to_ptr.vmem [resolvable:$true] %s55
      %58 = dma.hbm_to_vmem [thread:$0]  %s3, 384, %s56, [#allocation9]
    $region17: #{tpu_custom_call.1} parent=1 // pred_fallthru
      _
    // Predicated region
    $region18: #{tpu_custom_call.1} parent=1 // pred_check
      _
    $region19: #{tpu_custom_call.1} parent=1 // pred_check_branch
      %60 = sbr.rel (0) target = $region21
    $region20: #{tpu_custom_call.1} parent=1 // pred_region
      %61 = dma.done [#allocation3], 256
    $region21: #{tpu_custom_call.1} parent=1 // pred_fallthru
      _
    // Predicated region
    $region22: #{tpu_custom_call.1} parent=1 // pred_check
      _
    $region23: #{tpu_custom_call.1} parent=1 // pred_check_branch
      %63 = sbr.rel (0) target = $region25
    $region24: #{tpu_custom_call.1} parent=1 // pred_region
      %64 = dma.done [#allocation6], 12288
    $region25: #{tpu_custom_call.1} parent=1 // pred_fallthru
      _
    // Predicated region
    $region26: #{tpu_custom_call.1} parent=1 // pred_check
      _
    $region27: #{tpu_custom_call.1} parent=1 // pred_check_branch
      %66 = sbr.rel (0) target = $region29
    $region28: #{tpu_custom_call.1} parent=1 // pred_region
      %67 = dma.done [#allocation6], 4096
    $region29: #{tpu_custom_call.1} parent=1 // pred_fallthru
      _
    // Predicated region
    $region30: #{tpu_custom_call.1} parent=1 // pred_check
      _
    $region31: #{tpu_custom_call.1} parent=1 // pred_check_branch
      %69 = sbr.rel (0) target = $region33
    $region32: #{tpu_custom_call.1} parent=1 // pred_region
      %70 = dma.done [#allocation9], 384
    $region33: #{tpu_custom_call.1} parent=1 // pred_fallthru
      _
    %v72 = vld [vmem:[#allocation2] sm:$0xff]
    %v73 = vld [vmem:[#allocation2 + $0x8] sm:$0xff]
    %v74 = vmul.f32 %v72, 11.313708
    %v75 = vmul.f32 %v73, 11.313708
    %v76 = vld [vmem:[#allocation5] sm:$0xff]
    %v77 = vld [vmem:[#allocation5 + $0x8] sm:$0xf]
    %v78 = vld [vmem:[#allocation5 + $0x30] sm:$0xff]
    %v79 = vld [vmem:[#allocation5 + $0x38] sm:$0xf]
    %v80 = vld [vmem:[#allocation5 + $0x60] sm:$0xff]
    %v81 = vld [vmem:[#allocation5 + $0x68] sm:$0xf]
    %v82 = vld [vmem:[#allocation5 + $0x90] sm:$0xff]
    %v83 = vld [vmem:[#allocation5 + $0x98] sm:$0xf]
    %v84 = vld [vmem:[#allocation5 + $0xc0] sm:$0xff]
    %v85 = vld [vmem:[#allocation5 + $0xc8] sm:$0xf]
    %v86 = vld [vmem:[#allocation5 + $0xf0] sm:$0xff]
    %v87 = vld [vmem:[#allocation5 + $0xf8] sm:$0xf]
    %v88 = vld [vmem:[#allocation5 + $0x120] sm:$0xff]
    %v89 = vld [vmem:[#allocation5 + $0x128] sm:$0xf]
    %v90 = vld [vmem:[#allocation5 + $0x150] sm:$0xff]
    %v91 = vld [vmem:[#allocation5 + $0x158] sm:$0xf]
    %v92 = vld [vmem:[#allocation5 + $0x180] sm:$0xff]
    %v93 = vld [vmem:[#allocation5 + $0x188] sm:$0xf]
    %v94 = vld [vmem:[#allocation5 + $0x1b0] sm:$0xff]
    %v95 = vld [vmem:[#allocation5 + $0x1b8] sm:$0xf]
    %v96 = vld [vmem:[#allocation5 + $0x1e0] sm:$0xff]
    %v97 = vld [vmem:[#allocation5 + $0x1e8] sm:$0xf]
    %v98 = vld [vmem:[#allocation5 + $0x210] sm:$0xff]
    %v99 = vld [vmem:[#allocation5 + $0x218] sm:$0xf]
    %v100 = vld [vmem:[#allocation5 + $0x240] sm:$0xff]
    %v101 = vld [vmem:[#allocation5 + $0x248] sm:$0xf]
    %v102 = vld [vmem:[#allocation5 + $0x270] sm:$0xff]
    %v103 = vld [vmem:[#allocation5 + $0x278] sm:$0xf]
    %v104 = vld [vmem:[#allocation5 + $0x2a0] sm:$0xff]
    %v105 = vld [vmem:[#allocation5 + $0x2a8] sm:$0xf]
    %v106 = vld [vmem:[#allocation5 + $0x2d0] sm:$0xff]
    %v107 = vld [vmem:[#allocation5 + $0x2d8] sm:$0xf]
    %v108 = vld [vmem:[#allocation5 + $0xc] sm:$0xf]
    %v109 = vld [vmem:[#allocation5 + $0x3c] sm:$0xf]
    %v110 = vld [vmem:[#allocation5 + $0x6c] sm:$0xf]
    %v111 = vld [vmem:[#allocation5 + $0x9c] sm:$0xf]
    %v112 = vld [vmem:[#allocation5 + $0xcc] sm:$0xf]
    %v113 = vld [vmem:[#allocation5 + $0xfc] sm:$0xf]
    %v114 = vld [vmem:[#allocation5 + $0x12c] sm:$0xf]
    %v115 = vld [vmem:[#allocation5 + $0x15c] sm:$0xf]
    %v116 = vld [vmem:[#allocation5 + $0x18c] sm:$0xf]
    %v117 = vld [vmem:[#allocation5 + $0x1bc] sm:$0xf]
    %v118 = vld [vmem:[#allocation5 + $0x1ec] sm:$0xf]
    %v119 = vld [vmem:[#allocation5 + $0x21c] sm:$0xf]
    %v120 = vld [vmem:[#allocation5 + $0x24c] sm:$0xf]
    %v121 = vld [vmem:[#allocation5 + $0x27c] sm:$0xf]
    %v122 = vld [vmem:[#allocation5 + $0x2ac] sm:$0xf]
    %v123 = vld [vmem:[#allocation5 + $0x2dc] sm:$0xf]
    %v124 = vld [vmem:[#allocation5 + $0x10] sm:$0xff]
    %v125 = vld [vmem:[#allocation5 + $0x40] sm:$0xff]
    %v126 = vld [vmem:[#allocation5 + $0x70] sm:$0xff]
    %v127 = vld [vmem:[#allocation5 + $0xa0] sm:$0xff]
    %v128 = vld [vmem:[#allocation5 + $0xd0] sm:$0xff]
    %v129 = vld [vmem:[#allocation5 + $0x100] sm:$0xff]
    %v130 = vld [vmem:[#allocation5 + $0x130] sm:$0xff]
    %v131 = vld [vmem:[#allocation5 + $0x160] sm:$0xff]
    %v132 = vld [vmem:[#allocation5 + $0x190] sm:$0xff]
    %v133 = vld [vmem:[#allocation5 + $0x1c0] sm:$0xff]
    %v134 = vld [vmem:[#allocation5 + $0x1f0] sm:$0xff]
    %v135 = vld [vmem:[#allocation5 + $0x220] sm:$0xff]
    %v136 = vld [vmem:[#allocation5 + $0x250] sm:$0xff]
    %v137 = vld [vmem:[#allocation5 + $0x280] sm:$0xff]
    %v138 = vld [vmem:[#allocation5 + $0x2b0] sm:$0xff]
    %v139 = vld [vmem:[#allocation5 + $0x2e0] sm:$0xff]
    %v140 = vld [vmem:[#allocation7] sm:$0xf]
    %v141 = vld [vmem:[#allocation7 + $0x8] sm:$0xf]
    %v142 = vld [vmem:[#allocation7 + $0x10] sm:$0xf]
    %v143 = vld [vmem:[#allocation7 + $0x18] sm:$0xf]
    %v144 = vld [vmem:[#allocation7 + $0x20] sm:$0xf]
    %v145 = vld [vmem:[#allocation7 + $0x28] sm:$0xf]
    %v146 = vld [vmem:[#allocation7 + $0x30] sm:$0xf]
    %v147 = vld [vmem:[#allocation7 + $0x38] sm:$0xf]
    %v148 = vld [vmem:[#allocation7 + $0x40] sm:$0xf]
    %v149 = vld [vmem:[#allocation7 + $0x48] sm:$0xf]
    %v150 = vld [vmem:[#allocation7 + $0x50] sm:$0xf]
    %v151 = vld [vmem:[#allocation7 + $0x58] sm:$0xf]
    %v152 = vld [vmem:[#allocation7 + $0x60] sm:$0xf]
    %v153 = vld [vmem:[#allocation7 + $0x68] sm:$0xf]
    %v154 = vld [vmem:[#allocation7 + $0x70] sm:$0xf]
    %v155 = vld [vmem:[#allocation7 + $0x78] sm:$0xf]
    %v156 = vld [vmem:[#allocation7 + $0x80] sm:$0xf]
    %v157 = vld [vmem:[#allocation7 + $0x88] sm:$0xf]
    %v158 = vld [vmem:[#allocation7 + $0x90] sm:$0xf]
    %v159 = vld [vmem:[#allocation7 + $0x98] sm:$0xf]
    %v160 = vld [vmem:[#allocation7 + $0xa0] sm:$0xf]
    %v161 = vld [vmem:[#allocation7 + $0xa8] sm:$0xf]
    %v162 = vld [vmem:[#allocation7 + $0xb0] sm:$0xf]
    %v163 = vld [vmem:[#allocation7 + $0xb8] sm:$0xf]
    %v164 = vld [vmem:[#allocation7 + $0xc0] sm:$0xf]
    %v165 = vld [vmem:[#allocation7 + $0xc8] sm:$0xf]
    %v166 = vld [vmem:[#allocation7 + $0xd0] sm:$0xf]
    %v167 = vld [vmem:[#allocation7 + $0xd8] sm:$0xf]
    %v168 = vld [vmem:[#allocation7 + $0xe0] sm:$0xf]
    %v169 = vld [vmem:[#allocation7 + $0xe8] sm:$0xf]
    %v170 = vld [vmem:[#allocation7 + $0xf0] sm:$0xf]
    %v171 = vld [vmem:[#allocation7 + $0xf8] sm:$0xf]
    %v172 = vld [vmem:[#allocation8] sm:$0x7]
    %v173 = vld [vmem:[#allocation8 + $0x3] sm:$0x1]
    %v174 = vld [vmem:[#allocation8 + $0x4] sm:$0x1]
    %v175 = vld [vmem:[#allocation8 + $0x5] sm:$0x1]
    %v176 = vld [vmem:[#allocation8 + $0x6] sm:$0x3]
    %v177 = vld [vmem:[#allocation8 + $0x8] sm:$0x1]
    %v178 = vld [vmem:[#allocation8 + $0x9] sm:$0x1]
    %v179 = vld [vmem:[#allocation8 + $0xa] sm:$0x1]
    %v180 = vpack.c.bf16 %v75, %v74
    %v182 = vlaneseq
    %v183 = vshrl.u32 %v182, 7
    %v184 = vsub.s32 0, %v183
    %v185 = vrot.slane %v172, %v184
    %v186 = vlaneseq
    %v187 = vshrl.u32 %v186, 7
    %v188 = vsub.s32 1, %v187
    %v189 = vrot.slane %v172, %v188
    %v190 = vlaneseq
    %v191 = vshrl.u32 %v190, 7
    %v192 = vsub.s32 2, %v191
    %v193 = vrot.slane %v172, %v192
    %v229 = vunpack.c.l.b16 %v76
    %v230 = vunpack.c.h.b16 %v76
    %v231 = vunpack.c.l.b16 %v77
    %v232 = vunpack.c.l.b16 %v78
    %v233 = vunpack.c.h.b16 %v78
    %v234 = vunpack.c.l.b16 %v79
    %v235 = vunpack.c.l.b16 %v80
    %v236 = vunpack.c.h.b16 %v80
    %v237 = vunpack.c.l.b16 %v81
    %v238 = vunpack.c.l.b16 %v82
    %v239 = vunpack.c.h.b16 %v82
    %v240 = vunpack.c.l.b16 %v83
    %v241 = vunpack.c.l.b16 %v84
    %v242 = vunpack.c.h.b16 %v84
    %v243 = vunpack.c.l.b16 %v85
    %v244 = vunpack.c.l.b16 %v86
    %v245 = vunpack.c.h.b16 %v86
    %v246 = vunpack.c.l.b16 %v87
    %v247 = vunpack.c.l.b16 %v88
    %v248 = vunpack.c.h.b16 %v88
    %v249 = vunpack.c.l.b16 %v89
    %v250 = vunpack.c.l.b16 %v90
    %v251 = vunpack.c.h.b16 %v90
    %v252 = vunpack.c.l.b16 %v91
    %v253 = vunpack.c.l.b16 %v92
    %v254 = vunpack.c.h.b16 %v92
    %v255 = vunpack.c.l.b16 %v93
    %v256 = vunpack.c.l.b16 %v94
    %v257 = vunpack.c.h.b16 %v94
    %v258 = vunpack.c.l.b16 %v95
    %v259 = vunpack.c.l.b16 %v96
    %v260 = vunpack.c.h.b16 %v96
    %v261 = vunpack.c.l.b16 %v97
    %v262 = vunpack.c.l.b16 %v98
    %v263 = vunpack.c.h.b16 %v98
    %v264 = vunpack.c.l.b16 %v99
    %v265 = vunpack.c.l.b16 %v100
    %v266 = vunpack.c.h.b16 %v100
    %v267 = vunpack.c.l.b16 %v101
    %v268 = vunpack.c.l.b16 %v102
    %v269 = vunpack.c.h.b16 %v102
    %v270 = vunpack.c.l.b16 %v103
    %v271 = vunpack.c.l.b16 %v104
    %v272 = vunpack.c.h.b16 %v104
    %v273 = vunpack.c.l.b16 %v105
    %v274 = vunpack.c.l.b16 %v106
    %v275 = vunpack.c.h.b16 %v106
    %v276 = vunpack.c.l.b16 %v107
    %v277 = vpack.c.b16 %v232, %v229
    %v278 = vpack.c.b16 %v233, %v230
    %v279 = vpack.c.b16 %v234, %v231
    %v280 = vpack.c.b16 %v238, %v235
    %v281 = vpack.c.b16 %v239, %v236
    %v282 = vpack.c.b16 %v240, %v237
    %v283 = vpack.c.b16 %v244, %v241
    %v284 = vpack.c.b16 %v245, %v242
    %v285 = vpack.c.b16 %v246, %v243
    %v286 = vpack.c.b16 %v250, %v247
    %v287 = vpack.c.b16 %v251, %v248
    %v288 = vpack.c.b16 %v252, %v249
    %v289 = vpack.c.b16 %v256, %v253
    %v290 = vpack.c.b16 %v257, %v254
    %v291 = vpack.c.b16 %v258, %v255
    %v292 = vpack.c.b16 %v262, %v259
    %v293 = vpack.c.b16 %v263, %v260
    %v294 = vpack.c.b16 %v264, %v261
    %v295 = vpack.c.b16 %v268, %v265
    %v296 = vpack.c.b16 %v269, %v266
    %v297 = vpack.c.b16 %v270, %v267
    %v298 = vpack.c.b16 %v274, %v271
    %v299 = vpack.c.b16 %v275, %v272
    %v300 = vpack.c.b16 %v276, %v273
    %325 = vmatprep.subr.bf16.mxu0 %v299
    %326 = vmatpush1.bf16.msra.mxu0 %v298
    %327 = vmatprep.subr.bf16.mxu0 %v296
    %328 = vmatpush1.bf16.msra.mxu0 %v295
    %329 = vmatprep.subr.bf16.mxu0 %v293
    %330 = vmatpush1.bf16.msra.mxu0 %v292
    %331 = vmatprep.subr.bf16.mxu0 %v290
    %332 = vmatpush1.bf16.msra.mxu0 %v289
    %333 = vmatprep.subr.bf16.mxu0 %v287
    %334 = vmatpush1.bf16.msra.mxu0 %v286
    %335 = vmatprep.subr.bf16.mxu0 %v284
    %336 = vmatpush1.bf16.msra.mxu0 %v283
    %337 = vmatprep.subr.bf16.mxu0 %v281
    %338 = vmatpush1.bf16.msra.mxu0 %v280
    %339 = vmatprep.subr.bf16.mxu0 %v278
    %340 = vmatpush1.bf16.msra.mxu0 %v277
    %341 = vmatprep.subr.bf16.mxu0 0
    %342 = vmatpush2.bf16.msra.mxu0 0
    %343 = vmatprep.subr.bf16.mxu0 0
    %344 = vmatpush2.bf16.msra.mxu0 0
    %345 = vmatprep.subr.bf16.mxu0 0
    %346 = vmatpush2.bf16.msra.mxu0 0
    %347 = vmatprep.subr.bf16.mxu0 0
    %348 = vmatpush2.bf16.msra.mxu0 0
    %349 = vmatprep.subr.bf16.mxu0 0
    %350 = vmatpush2.bf16.msra.mxu0 0
    %351 = vmatprep.subr.bf16.mxu0 0
    %352 = vmatpush2.bf16.msra.mxu0 0
    %353 = vmatprep.subr.bf16.mxu0 0
    %354 = vmatpush2.bf16.msra.mxu0 0
    %355 = vmatprep.subr.bf16.mxu0 0
    %356 = vmatpush2.bf16.msra.mxu0 0
    %357 = vmatprep.mubr.bf16.mxu0 0
    %358 = vmatmul.mubr.bf16.gmra.mxu0 %v180
    %v359 = vpop.f32.mrf.mxu0
    %v360 = vadd.f32 %v185, %v359
    %v361 = vpop.f32.mrf.mxu0
    %v362 = vadd.f32 %v189, %v361
    %v363 = vpop.f32.mrf.mxu0
    %v364 = vadd.f32 %v185, %v363
    %v365 = vpop.f32.mrf.mxu0
    %v366 = vadd.f32 %v189, %v365
    %367 = vdwg.mxu0
    %368 = vmatprep.subr.bf16.mxu0 0
    %369 = vmatpush1.bf16.msra.mxu0 %v300
    %370 = vmatprep.subr.bf16.mxu0 0
    %371 = vmatpush1.bf16.msra.mxu0 %v297
    %372 = vmatprep.subr.bf16.mxu0 0
    %373 = vmatpush1.bf16.msra.mxu0 %v294
    %374 = vmatprep.subr.bf16.mxu0 0
    %375 = vmatpush1.bf16.msra.mxu0 %v291
    %376 = vmatprep.subr.bf16.mxu0 0
    %377 = vmatpush1.bf16.msra.mxu0 %v288
    %378 = vmatprep.subr.bf16.mxu0 0
    %379 = vmatpush1.bf16.msra.mxu0 %v285
    %380 = vmatprep.subr.bf16.mxu0 0
    %381 = vmatpush1.bf16.msra.mxu0 %v282
    %382 = vmatprep.subr.bf16.mxu0 0
    %383 = vmatpush1.bf16.msra.mxu0 %v279
    %384 = vmatprep.subr.bf16.mxu0 0
    %385 = vmatpush2.bf16.msra.mxu0 0
    %386 = vmatprep.subr.bf16.mxu0 0
    %387 = vmatpush2.bf16.msra.mxu0 0
    %388 = vmatprep.subr.bf16.mxu0 0
    %389 = vmatpush2.bf16.msra.mxu0 0
    %390 = vmatprep.subr.bf16.mxu0 0
    %391 = vmatpush2.bf16.msra.mxu0 0
    %392 = vmatprep.subr.bf16.mxu0 0
    %393 = vmatpush2.bf16.msra.mxu0 0
    %394 = vmatprep.subr.bf16.mxu0 0
    %395 = vmatpush2.bf16.msra.mxu0 0
    %396 = vmatprep.subr.bf16.mxu0 0
    %397 = vmatpush2.bf16.msra.mxu0 0
    %398 = vmatprep.subr.bf16.mxu0 0
    %399 = vmatpush2.bf16.msra.mxu0 0
    %400 = vmatprep.mubr.bf16.mxu0 0
    %401 = vmatmul.mubr.bf16.gmra.mxu0 %v180
    %v402 = vpop.f32.mrf.mxu0
    %v403 = vadd.f32 %v193, %v402
    %v404 = vpop.f32.mrf.mxu0
    %v405 = vpop.f32.mrf.mxu0
    %v406 = vadd.f32 %v193, %v405
    %v407 = vpop.f32.mrf.mxu0
    %408 = vdwg.mxu0
    %v409 = vpack.c.bf16 %v360, %v360
    %v410 = vpack.c.bf16 %v364, %v364
    %v411 = vpack.c.bf16 %v362, %v362
    %v412 = vpack.c.bf16 %v366, %v366
    %v413 = vpack.c.bf16 %v403, %v403
    %v414 = vpack.c.bf16 %v406, %v406
    %415 = vmatprep.subr.bf16.mxu0 0
    %416 = vmatpush1.bf16.xpose.msra.mxu0 0
    %417 = vmatprep.subr.bf16.mxu0 0
    %418 = vmatpush1.bf16.xpose.msra.mxu0 0
    %419 = vmatprep.subr.bf16.mxu0 0
    %420 = vmatpush1.bf16.xpose.msra.mxu0 0
    %421 = vmatprep.subr.bf16.mxu0 0
    %422 = vmatpush1.bf16.xpose.msra.mxu0 0
    %423 = vmatprep.subr.bf16.mxu0 0
    %424 = vmatpush1.bf16.xpose.msra.mxu0 0
    %425 = vmatprep.subr.bf16.mxu0 0
    %426 = vmatpush1.bf16.xpose.msra.mxu0 0
    %427 = vmatprep.subr.bf16.mxu0 0
    %428 = vmatpush1.bf16.xpose.msra.mxu0 0
    %429 = vmatprep.subr.bf16.mxu0 0
    %430 = vmatpush1.bf16.xpose.msra.mxu0 %v411
    %431 = vmatprep.subr.bf16.mxu0 0
    %432 = vmatpush2.bf16.xpose.msra.mxu0 0
    %433 = vmatprep.subr.bf16.mxu0 0
    %434 = vmatpush2.bf16.xpose.msra.mxu0 0
    %435 = vmatprep.subr.bf16.mxu0 0
    %436 = vmatpush2.bf16.xpose.msra.mxu0 0
    %437 = vmatprep.subr.bf16.mxu0 0
    %438 = vmatpush2.bf16.xpose.msra.mxu0 0
    %439 = vmatprep.subr.bf16.mxu0 0
    %440 = vmatpush2.bf16.xpose.msra.mxu0 0
    %441 = vmatprep.subr.bf16.mxu0 0
    %442 = vmatpush2.bf16.xpose.msra.mxu0 0
    %443 = vmatprep.subr.bf16.mxu0 0
    %444 = vmatpush2.bf16.xpose.msra.mxu0 0
    %445 = vmatprep.subr.bf16.mxu0 0
    %446 = vmatpush2.bf16.xpose.msra.mxu0 0
    %447 = vmatprep.mubr.bf16.mxu0 0
    %448 = vmatmul.mubr.bf16.gmra.mxu0 %v409
    %v449 = vpop.f32.mrf.mxu0
    %v450 = vadd.f32 0.0, %v449
    %v451 = vpop.f32.mrf.mxu0
    %v452 = vpop.f32.mrf.mxu0
    %v453 = vpop.f32.mrf.mxu0
    %454 = vdwg.mxu0
    %455 = vmatprep.subr.bf16.mxu0 0
    %456 = vmatpush1.bf16.xpose.msra.mxu0 0
    %457 = vmatprep.subr.bf16.mxu0 0
    %458 = vmatpush1.bf16.xpose.msra.mxu0 0
    %459 = vmatprep.subr.bf16.mxu0 0
    %460 = vmatpush1.bf16.xpose.msra.mxu0 0
    %461 = vmatprep.subr.bf16.mxu0 0
    %462 = vmatpush1.bf16.xpose.msra.mxu0 0
    %463 = vmatprep.subr.bf16.mxu0 0
    %464 = vmatpush1.bf16.xpose.msra.mxu0 0
    %465 = vmatprep.subr.bf16.mxu0 0
    %466 = vmatpush1.bf16.xpose.msra.mxu0 0
    %467 = vmatprep.subr.bf16.mxu0 0
    %468 = vmatpush1.bf16.xpose.msra.mxu0 0
    %469 = vmatprep.subr.bf16.mxu0 0
    %470 = vmatpush1.bf16.xpose.msra.mxu0 %v412
    %471 = vmatprep.subr.bf16.mxu0 0
    %472 = vmatpush2.bf16.xpose.msra.mxu0 0
    %473 = vmatprep.subr.bf16.mxu0 0
    %474 = vmatpush2.bf16.xpose.msra.mxu0 0
    %475 = vmatprep.subr.bf16.mxu0 0
    %476 = vmatpush2.bf16.xpose.msra.mxu0 0
    %477 = vmatprep.subr.bf16.mxu0 0
    %478 = vmatpush2.bf16.xpose.msra.mxu0 0
    %479 = vmatprep.subr.bf16.mxu0 0
    %480 = vmatpush2.bf16.xpose.msra.mxu0 0
    %481 = vmatprep.subr.bf16.mxu0 0
    %482 = vmatpush2.bf16.xpose.msra.mxu0 0
    %483 = vmatprep.subr.bf16.mxu0 0
    %484 = vmatpush2.bf16.xpose.msra.mxu0 0
    %485 = vmatprep.subr.bf16.mxu0 0
    %486 = vmatpush2.bf16.xpose.msra.mxu0 0
    %487 = vmatprep.mubr.bf16.mxu0 0
    %488 = vmatmul.mubr.bf16.gmra.mxu0 %v410
    %v489 = vpop.f32.mrf.mxu0
    %v490 = vadd.f32 0.0, %v489
    %v491 = vpop.f32.mrf.mxu0
    %v492 = vpop.f32.mrf.mxu0
    %v493 = vpop.f32.mrf.mxu0
    %494 = vdwg.mxu0
    %vm495 = vcmask 64512
    %v496 = vsel %vm495, %v450, -inf
    %497 = vmax.xlane.f32.xlu0 %v496
    %v498 = vpop.xlane.xlu0 %497
    %v499 = vsel %vm495, %v490, -inf
    %500 = vmax.xlane.f32.xlu0 %v499
    %v501 = vpop.xlane.xlu0 %500
    %v502 = vsub.f32 %v450, %v498
    %v503 = vsub.f32 %v490, %v501
    %v504 = vmul.f32 %v502, 1.442695
    %v505 = vpow.pop %v504
    %v506 = vmul.f32 %v503, 1.442695
    %v507 = vpow.pop %v506
    %v508 = vsel %vm495, %v505, 0.0
    %509 = vadd.xlane.f32.xlu0 %v508
    %v510 = vpop.xlane.xlu0 %509
    %v511 = vsel %vm495, %v507, 0.0
    %512 = vadd.xlane.f32.xlu0 %v511
    %v513 = vpop.xlane.xlu0 %512
    %v514 = vrcp.pop %v510
    %v515 = vrcp.pop %v513
    %v516 = vmul.f32 %v505, %v514
    %v517 = vmul.f32 %v507, %v515
    %v518 = vpack.c.bf16 %v516, %v516
    %v519 = vpack.c.bf16 %v517, %v517
    %v521 = vsel %vm495, %v518, 0
    %vm523 = vcmask 1043456
    %v525 = vsel %vm523, %v413, 0
    %527 = vmatprep.subr.bf16.mxu0 0
    %528 = vmatpush1.bf16.msra.mxu0 0
    %529 = vmatprep.subr.bf16.mxu0 0
    %530 = vmatpush1.bf16.msra.mxu0 0
    %531 = vmatprep.subr.bf16.mxu0 0
    %532 = vmatpush1.bf16.msra.mxu0 0
    %533 = vmatprep.subr.bf16.mxu0 0
    %534 = vmatpush1.bf16.msra.mxu0 0
    %535 = vmatprep.subr.bf16.mxu0 0
    %536 = vmatpush1.bf16.msra.mxu0 0
    %537 = vmatprep.subr.bf16.mxu0 0
    %538 = vmatpush1.bf16.msra.mxu0 0
    %539 = vmatprep.subr.bf16.mxu0 0
    %540 = vmatpush1.bf16.msra.mxu0 0
    %541 = vmatprep.subr.bf16.mxu0 0
    %542 = vmatpush1.bf16.msra.mxu0 %v525
    %543 = vmatprep.subr.bf16.mxu0 0
    %544 = vmatpush2.bf16.msra.mxu0 0
    %545 = vmatprep.subr.bf16.mxu0 0
    %546 = vmatpush2.bf16.msra.mxu0 0
    %547 = vmatprep.subr.bf16.mxu0 0
    %548 = vmatpush2.bf16.msra.mxu0 0
    %549 = vmatprep.subr.bf16.mxu0 0
    %550 = vmatpush2.bf16.msra.mxu0 0
    %551 = vmatprep.subr.bf16.mxu0 0
    %552 = vmatpush2.bf16.msra.mxu0 0
    %553 = vmatprep.subr.bf16.mxu0 0
    %554 = vmatpush2.bf16.msra.mxu0 0
    %555 = vmatprep.subr.bf16.mxu0 0
    %556 = vmatpush2.bf16.msra.mxu0 0
    %557 = vmatprep.subr.bf16.mxu0 0
    %558 = vmatpush2.bf16.msra.mxu0 0
    %559 = vmatprep.mubr.bf16.mxu0 0
    %560 = vmatmul.mubr.bf16.gmra.mxu0 %v521
    %v561 = vpop.f32.mrf.mxu0
    %v562 = vadd.f32 0.0, %v561
    %v563 = vpop.f32.mrf.mxu0
    %v564 = vpop.f32.mrf.mxu0
    %v565 = vpop.f32.mrf.mxu0
    %566 = vdwg.mxu0
    %v568 = vsel %vm495, %v519, 0
    %v571 = vsel %vm523, %v414, 0
    %573 = vmatprep.subr.bf16.mxu0 0
    %574 = vmatpush1.bf16.msra.mxu0 0
    %575 = vmatprep.subr.bf16.mxu0 0
    %576 = vmatpush1.bf16.msra.mxu0 0
    %577 = vmatprep.subr.bf16.mxu0 0
    %578 = vmatpush1.bf16.msra.mxu0 0
    %579 = vmatprep.subr.bf16.mxu0 0
    %580 = vmatpush1.bf16.msra.mxu0 0
    %581 = vmatprep.subr.bf16.mxu0 0
    %582 = vmatpush1.bf16.msra.mxu0 0
    %583 = vmatprep.subr.bf16.mxu0 0
    %584 = vmatpush1.bf16.msra.mxu0 0
    %585 = vmatprep.subr.bf16.mxu0 0
    %586 = vmatpush1.bf16.msra.mxu0 0
    %587 = vmatprep.subr.bf16.mxu0 0
    %588 = vmatpush1.bf16.msra.mxu0 %v571
    %589 = vmatprep.subr.bf16.mxu0 0
    %590 = vmatpush2.bf16.msra.mxu0 0
    %591 = vmatprep.subr.bf16.mxu0 0
    %592 = vmatpush2.bf16.msra.mxu0 0
    %593 = vmatprep.subr.bf16.mxu0 0
    %594 = vmatpush2.bf16.msra.mxu0 0
    %595 = vmatprep.subr.bf16.mxu0 0
    %596 = vmatpush2.bf16.msra.mxu0 0
    %597 = vmatprep.subr.bf16.mxu0 0
    %598 = vmatpush2.bf16.msra.mxu0 0
    %599 = vmatprep.subr.bf16.mxu0 0
    %600 = vmatpush2.bf16.msra.mxu0 0
    %601 = vmatprep.subr.bf16.mxu0 0
    %602 = vmatpush2.bf16.msra.mxu0 0
    %603 = vmatprep.subr.bf16.mxu0 0
    %604 = vmatpush2.bf16.msra.mxu0 0
    %605 = vmatprep.mubr.bf16.mxu0 0
    %606 = vmatmul.mubr.bf16.gmra.mxu0 %v568
    %v607 = vpop.f32.mrf.mxu0
    %v608 = vadd.f32 0.0, %v607
    %v609 = vpop.f32.mrf.mxu0
    %v610 = vpop.f32.mrf.mxu0
    %v611 = vpop.f32.mrf.mxu0
    %612 = vdwg.mxu0
    %v613 = vpack.c.bf16 %v608, %v562
    %v615 = vlaneseq
    %v616 = vshrl.u32 %v615, 7
    %v617 = vsub.s32 0, %v616
    %v618 = vrot.slane %v173, %v617
    %v636 = vunpack.c.l.b16 %v108
    %v637 = vunpack.c.l.b16 %v109
    %v638 = vunpack.c.l.b16 %v110
    %v639 = vunpack.c.l.b16 %v111
    %v640 = vunpack.c.l.b16 %v112
    %v641 = vunpack.c.l.b16 %v113
    %v642 = vunpack.c.l.b16 %v114
    %v643 = vunpack.c.l.b16 %v115
    %v644 = vunpack.c.l.b16 %v116
    %v645 = vunpack.c.l.b16 %v117
    %v646 = vunpack.c.l.b16 %v118
    %v647 = vunpack.c.l.b16 %v119
    %v648 = vunpack.c.l.b16 %v120
    %v649 = vunpack.c.l.b16 %v121
    %v650 = vunpack.c.l.b16 %v122
    %v651 = vunpack.c.l.b16 %v123
    %v652 = vpack.c.b16 %v637, %v636
    %v653 = vpack.c.b16 %v639, %v638
    %v654 = vpack.c.b16 %v641, %v640
    %v655 = vpack.c.b16 %v643, %v642
    %v656 = vpack.c.b16 %v645, %v644
    %v657 = vpack.c.b16 %v647, %v646
    %v658 = vpack.c.b16 %v649, %v648
    %v659 = vpack.c.b16 %v651, %v650
    %668 = vmatprep.subr.bf16.mxu0 0
    %669 = vmatpush1.bf16.msra.mxu0 %v659
    %670 = vmatprep.subr.bf16.mxu0 0
    %671 = vmatpush1.bf16.msra.mxu0 %v658
    %672 = vmatprep.subr.bf16.mxu0 0
    %673 = vmatpush1.bf16.msra.mxu0 %v657
    %674 = vmatprep.subr.bf16.mxu0 0
    %675 = vmatpush1.bf16.msra.mxu0 %v656
    %676 = vmatprep.subr.bf16.mxu0 0
    %677 = vmatpush1.bf16.msra.mxu0 %v655
    %678 = vmatprep.subr.bf16.mxu0 0
    %679 = vmatpush1.bf16.msra.mxu0 %v654
    %680 = vmatprep.subr.bf16.mxu0 0
    %681 = vmatpush1.bf16.msra.mxu0 %v653
    %682 = vmatprep.subr.bf16.mxu0 0
    %683 = vmatpush1.bf16.msra.mxu0 %v652
    %684 = vmatprep.subr.bf16.mxu0 0
    %685 = vmatpush2.bf16.msra.mxu0 0
    %686 = vmatprep.subr.bf16.mxu0 0
    %687 = vmatpush2.bf16.msra.mxu0 0
    %688 = vmatprep.subr.bf16.mxu0 0
    %689 = vmatpush2.bf16.msra.mxu0 0
    %690 = vmatprep.subr.bf16.mxu0 0
    %691 = vmatpush2.bf16.msra.mxu0 0
    %692 = vmatprep.subr.bf16.mxu0 0
    %693 = vmatpush2.bf16.msra.mxu0 0
    %694 = vmatprep.subr.bf16.mxu0 0
    %695 = vmatpush2.bf16.msra.mxu0 0
    %696 = vmatprep.subr.bf16.mxu0 0
    %697 = vmatpush2.bf16.msra.mxu0 0
    %698 = vmatprep.subr.bf16.mxu0 0
    %699 = vmatpush2.bf16.msra.mxu0 0
    %700 = vmatprep.mubr.bf16.mxu0 0
    %701 = vmatmul.mubr.bf16.gmra.mxu0 %v613
    %v702 = vpop.f32.mrf.mxu0
    %v703 = vadd.f32 %v618, %v702
    %v704 = vpop.f32.mrf.mxu0
    %v705 = vpop.f32.mrf.mxu0
    %v706 = vadd.f32 %v618, %v705
    %v707 = vpop.f32.mrf.mxu0
    %708 = vdwg.mxu0
    %v709 = vadd.f32 %v74, %v703
    %v710 = vadd.f32 %v75, %v706
    %711 = vadd.xlane.f32.xlu0 %v709
    %v712 = vpop.xlane.xlu0 %711
    %713 = vadd.xlane.f32.xlu0 %v710
    %v714 = vpop.xlane.xlu0 %713
    %v715 = vrcp.pop 128.0
    %v716 = vmul.f32 %v712, %v715
    %v717 = vmul.f32 %v714, %v715
    %v718 = vsub.f32 %v709, %v716
    %v719 = vsub.f32 %v710, %v717
    %v720 = vmul.f32 %v718, %v718
    %v721 = vmul.f32 %v719, %v719
    %722 = vadd.xlane.f32.xlu0 %v720
    %v723 = vpop.xlane.xlu0 %722
    %724 = vadd.xlane.f32.xlu0 %v721
    %v725 = vpop.xlane.xlu0 %724
    %v726 = vmul.f32 %v723, %v715
    %v727 = vmul.f32 %v725, %v715
    %v728 = vadd.f32 %v726, 1e-05
    %v729 = vadd.f32 %v727, 1e-05
    %v730 = vrsqrt.pop %v728
    %v731 = vrsqrt.pop %v729
    %v732 = vmul.f32 %v718, %v730
    %v733 = vmul.f32 %v719, %v731
    %v735 = vlaneseq
    %v736 = vshrl.u32 %v735, 7
    %v737 = vsub.s32 0, %v736
    %v738 = vrot.slane %v174, %v737
    %v740 = vmul.f32 %v732, %v738
    %v741 = vmul.f32 %v733, %v738
    %v743 = vlaneseq
    %v744 = vshrl.u32 %v743, 7
    %v745 = vsub.s32 0, %v744
    %v746 = vrot.slane %v175, %v745
    %v748 = vadd.f32 %v740, %v746
    %v749 = vadd.f32 %v741, %v746
    %v750 = vpack.c.bf16 %v749, %v748
    %v752 = vlaneseq
    %v753 = vshrl.u32 %v752, 7
    %v754 = vsub.s32 0, %v753
    %v755 = vrot.slane %v176, %v754
    %v756 = vlaneseq
    %v757 = vshrl.u32 %v756, 7
    %v758 = vsub.s32 1, %v757
    %v759 = vrot.slane %v176, %v758
    %v778 = vunpack.c.l.b16 %v124
    %v779 = vunpack.c.h.b16 %v124
    %v780 = vunpack.c.l.b16 %v125
    %v781 = vunpack.c.h.b16 %v125
    %v782 = vunpack.c.l.b16 %v126
    %v783 = vunpack.c.h.b16 %v126
    %v784 = vunpack.c.l.b16 %v127
    %v785 = vunpack.c.h.b16 %v127
    %v786 = vunpack.c.l.b16 %v128
    %v787 = vunpack.c.h.b16 %v128
    %v788 = vunpack.c.l.b16 %v129
    %v789 = vunpack.c.h.b16 %v129
    %v790 = vunpack.c.l.b16 %v130
    %v791 = vunpack.c.h.b16 %v130
    %v792 = vunpack.c.l.b16 %v131
    %v793 = vunpack.c.h.b16 %v131
    %v794 = vunpack.c.l.b16 %v132
    %v795 = vunpack.c.h.b16 %v132
    %v796 = vunpack.c.l.b16 %v133
    %v797 = vunpack.c.h.b16 %v133
    %v798 = vunpack.c.l.b16 %v134
    %v799 = vunpack.c.h.b16 %v134
    %v800 = vunpack.c.l.b16 %v135
    %v801 = vunpack.c.h.b16 %v135
    %v802 = vunpack.c.l.b16 %v136
    %v803 = vunpack.c.h.b16 %v136
    %v804 = vunpack.c.l.b16 %v137
    %v805 = vunpack.c.h.b16 %v137
    %v806 = vunpack.c.l.b16 %v138
    %v807 = vunpack.c.h.b16 %v138
    %v808 = vunpack.c.l.b16 %v139
    %v809 = vunpack.c.h.b16 %v139
    %v810 = vpack.c.b16 %v780, %v778
    %v811 = vpack.c.b16 %v781, %v779
    %v812 = vpack.c.b16 %v784, %v782
    %v813 = vpack.c.b16 %v785, %v783
    %v814 = vpack.c.b16 %v788, %v786
    %v815 = vpack.c.b16 %v789, %v787
    %v816 = vpack.c.b16 %v792, %v790
    %v817 = vpack.c.b16 %v793, %v791
    %v818 = vpack.c.b16 %v796, %v794
    %v819 = vpack.c.b16 %v797, %v795
    %v820 = vpack.c.b16 %v800, %v798
    %v821 = vpack.c.b16 %v801, %v799
    %v822 = vpack.c.b16 %v804, %v802
    %v823 = vpack.c.b16 %v805, %v803
    %v824 = vpack.c.b16 %v808, %v806
    %v825 = vpack.c.b16 %v809, %v807
    %842 = vmatprep.subr.bf16.mxu0 %v825
    %843 = vmatpush1.bf16.msra.mxu0 %v824
    %844 = vmatprep.subr.bf16.mxu0 %v823
    %845 = vmatpush1.bf16.msra.mxu0 %v822
    %846 = vmatprep.subr.bf16.mxu0 %v821
    %847 = vmatpush1.bf16.msra.mxu0 %v820
    %848 = vmatprep.subr.bf16.mxu0 %v819
    %849 = vmatpush1.bf16.msra.mxu0 %v818
    %850 = vmatprep.subr.bf16.mxu0 %v817
    %851 = vmatpush1.bf16.msra.mxu0 %v816
    %852 = vmatprep.subr.bf16.mxu0 %v815
    %853 = vmatpush1.bf16.msra.mxu0 %v814
    %854 = vmatprep.subr.bf16.mxu0 %v813
    %855 = vmatpush1.bf16.msra.mxu0 %v812
    %856 = vmatprep.subr.bf16.mxu0 %v811
    %857 = vmatpush1.bf16.msra.mxu0 %v810
    %858 = vmatprep.subr.bf16.mxu0 0
    %859 = vmatpush2.bf16.msra.mxu0 0
    %860 = vmatprep.subr.bf16.mxu0 0
    %861 = vmatpush2.bf16.msra.mxu0 0
    %862 = vmatprep.subr.bf16.mxu0 0
    %863 = vmatpush2.bf16.msra.mxu0 0
    %864 = vmatprep.subr.bf16.mxu0 0
    %865 = vmatpush2.bf16.msra.mxu0 0
    %866 = vmatprep.subr.bf16.mxu0 0
    %867 = vmatpush2.bf16.msra.mxu0 0
    %868 = vmatprep.subr.bf16.mxu0 0
    %869 = vmatpush2.bf16.msra.mxu0 0
    %870 = vmatprep.subr.bf16.mxu0 0
    %871 = vmatpush2.bf16.msra.mxu0 0
    %872 = vmatprep.subr.bf16.mxu0 0
    %873 = vmatpush2.bf16.msra.mxu0 0
    %874 = vmatprep.mubr.bf16.mxu0 0
    %875 = vmatmul.mubr.bf16.gmra.mxu0 %v750
    %v876 = vpop.f32.mrf.mxu0
    %v877 = vadd.f32 %v755, %v876
    %v878 = vpop.f32.mrf.mxu0
    %v879 = vadd.f32 %v759, %v878
    %v880 = vpop.f32.mrf.mxu0
    %v881 = vadd.f32 %v755, %v880
    %v882 = vpop.f32.mrf.mxu0
    %v883 = vadd.f32 %v759, %v882
    %884 = vdwg.mxu0
    %v885 = vmax.f32 %v877, 0.0
    %v886 = vmax.f32 %v879, 0.0
    %v887 = vmax.f32 %v881, 0.0
    %v888 = vmax.f32 %v883, 0.0
    %v889 = vpack.c.bf16 %v887, %v885
    %v890 = vpack.c.bf16 %v888, %v886
    %v892 = vlaneseq
    %v893 = vshrl.u32 %v892, 7
    %v894 = vsub.s32 0, %v893
    %v895 = vrot.slane %v177, %v894
    %v929 = vunpack.c.l.b16 %v140
    %v930 = vunpack.c.l.b16 %v141
    %v931 = vunpack.c.l.b16 %v142
    %v932 = vunpack.c.l.b16 %v143
    %v933 = vunpack.c.l.b16 %v144
    %v934 = vunpack.c.l.b16 %v145
    %v935 = vunpack.c.l.b16 %v146
    %v936 = vunpack.c.l.b16 %v147
    %v937 = vunpack.c.l.b16 %v148
    %v938 = vunpack.c.l.b16 %v149
    %v939 = vunpack.c.l.b16 %v150
    %v940 = vunpack.c.l.b16 %v151
    %v941 = vunpack.c.l.b16 %v152
    %v942 = vunpack.c.l.b16 %v153
    %v943 = vunpack.c.l.b16 %v154
    %v944 = vunpack.c.l.b16 %v155
    %v945 = vunpack.c.l.b16 %v156
    %v946 = vunpack.c.l.b16 %v157
    %v947 = vunpack.c.l.b16 %v158
    %v948 = vunpack.c.l.b16 %v159
    %v949 = vunpack.c.l.b16 %v160
    %v950 = vunpack.c.l.b16 %v161
    %v951 = vunpack.c.l.b16 %v162
    %v952 = vunpack.c.l.b16 %v163
    %v953 = vunpack.c.l.b16 %v164
    %v954 = vunpack.c.l.b16 %v165
    %v955 = vunpack.c.l.b16 %v166
    %v956 = vunpack.c.l.b16 %v167
    %v957 = vunpack.c.l.b16 %v168
    %v958 = vunpack.c.l.b16 %v169
    %v959 = vunpack.c.l.b16 %v170
    %v960 = vunpack.c.l.b16 %v171
    %v961 = vpack.c.b16 %v930, %v929
    %v962 = vpack.c.b16 %v932, %v931
    %v963 = vpack.c.b16 %v934, %v933
    %v964 = vpack.c.b16 %v936, %v935
    %v965 = vpack.c.b16 %v938, %v937
    %v966 = vpack.c.b16 %v940, %v939
    %v967 = vpack.c.b16 %v942, %v941
    %v968 = vpack.c.b16 %v944, %v943
    %v969 = vpack.c.b16 %v946, %v945
    %v970 = vpack.c.b16 %v948, %v947
    %v971 = vpack.c.b16 %v950, %v949
    %v972 = vpack.c.b16 %v952, %v951
    %v973 = vpack.c.b16 %v954, %v953
    %v974 = vpack.c.b16 %v956, %v955
    %v975 = vpack.c.b16 %v958, %v957
    %v976 = vpack.c.b16 %v960, %v959
    %993 = vmatprep.subr.bf16.mxu0 0
    %994 = vmatpush1.bf16.msra.mxu0 %v968
    %995 = vmatprep.subr.bf16.mxu0 0
    %996 = vmatpush1.bf16.msra.mxu0 %v967
    %997 = vmatprep.subr.bf16.mxu0 0
    %998 = vmatpush1.bf16.msra.mxu0 %v966
    %999 = vmatprep.subr.bf16.mxu0 0
    %1000 = vmatpush1.bf16.msra.mxu0 %v965
    %1001 = vmatprep.subr.bf16.mxu0 0
    %1002 = vmatpush1.bf16.msra.mxu0 %v964
    %1003 = vmatprep.subr.bf16.mxu0 0
    %1004 = vmatpush1.bf16.msra.mxu0 %v963
    %1005 = vmatprep.subr.bf16.mxu0 0
    %1006 = vmatpush1.bf16.msra.mxu0 %v962
    %1007 = vmatprep.subr.bf16.mxu0 0
    %1008 = vmatpush1.bf16.msra.mxu0 %v961
    %1009 = vmatprep.subr.bf16.mxu0 0
    %1010 = vmatpush2.bf16.msra.mxu0 %v976
    %1011 = vmatprep.subr.bf16.mxu0 0
    %1012 = vmatpush2.bf16.msra.mxu0 %v975
    %1013 = vmatprep.subr.bf16.mxu0 0
    %1014 = vmatpush2.bf16.msra.mxu0 %v974
    %1015 = vmatprep.subr.bf16.mxu0 0
    %1016 = vmatpush2.bf16.msra.mxu0 %v973
    %1017 = vmatprep.subr.bf16.mxu0 0
    %1018 = vmatpush2.bf16.msra.mxu0 %v972
    %1019 = vmatprep.subr.bf16.mxu0 0
    %1020 = vmatpush2.bf16.msra.mxu0 %v971
    %1021 = vmatprep.subr.bf16.mxu0 0
    %1022 = vmatpush2.bf16.msra.mxu0 %v970
    %1023 = vmatprep.subr.bf16.mxu0 0
    %1024 = vmatpush2.bf16.msra.mxu0 %v969
    %1025 = vmatprep.mubr.bf16.mxu0 %v890
    %1026 = vmatmul.mubr.bf16.gmra.mxu0 %v889
    %v1027 = vpop.f32.mrf.mxu0
    %v1028 = vadd.f32 %v895, %v1027
    %v1029 = vpop.f32.mrf.mxu0
    %v1030 = vpop.f32.mrf.mxu0
    %v1031 = vadd.f32 %v895, %v1030
    %v1032 = vpop.f32.mrf.mxu0
    %1033 = vdwg.mxu0
    %v1034 = vadd.f32 %v748, %v1028
    %v1035 = vadd.f32 %v749, %v1031
    %1036 = vadd.xlane.f32.xlu0 %v1034
    %v1037 = vpop.xlane.xlu0 %1036
    %1038 = vadd.xlane.f32.xlu0 %v1035
    %v1039 = vpop.xlane.xlu0 %1038
    %v1040 = vmul.f32 %v1037, %v715
    %v1041 = vmul.f32 %v1039, %v715
    %v1042 = vsub.f32 %v1034, %v1040
    %v1043 = vsub.f32 %v1035, %v1041
    %v1044 = vmul.f32 %v1042, %v1042
    %v1045 = vmul.f32 %v1043, %v1043
    %1046 = vadd.xlane.f32.xlu0 %v1044
    %v1047 = vpop.xlane.xlu0 %1046
    %1048 = vadd.xlane.f32.xlu0 %v1045
    %v1049 = vpop.xlane.xlu0 %1048
    %v1050 = vmul.f32 %v1047, %v715
    %v1051 = vmul.f32 %v1049, %v715
    %v1052 = vadd.f32 %v1050, 1e-05
    %v1053 = vadd.f32 %v1051, 1e-05
    %v1054 = vrsqrt.pop %v1052
    %v1055 = vrsqrt.pop %v1053
    %v1056 = vmul.f32 %v1042, %v1054
    %v1057 = vmul.f32 %v1043, %v1055
    %v1059 = vlaneseq
    %v1060 = vshrl.u32 %v1059, 7
    %v1061 = vsub.s32 0, %v1060
    %v1062 = vrot.slane %v178, %v1061
    %v1064 = vmul.f32 %v1056, %v1062
    %v1065 = vmul.f32 %v1057, %v1062
    %v1067 = vlaneseq
    %v1068 = vshrl.u32 %v1067, 7
    %v1069 = vsub.s32 0, %v1068
    %v1070 = vrot.slane %v179, %v1069
    %v1072 = vadd.f32 %v1064, %v1070
    %v1073 = vadd.f32 %v1065, %v1070
    %v1074 = vld [vmem:[#allocation5 + $0x18] sm:$0xff]
    %v1075 = vld [vmem:[#allocation5 + $0x20] sm:$0xf]
    %v1076 = vld [vmem:[#allocation5 + $0x48] sm:$0xff]
    %v1077 = vld [vmem:[#allocation5 + $0x50] sm:$0xf]
    %v1078 = vld [vmem:[#allocation5 + $0x78] sm:$0xff]
    %v1079 = vld [vmem:[#allocation5 + $0x80] sm:$0xf]
    %v1080 = vld [vmem:[#allocation5 + $0xa8] sm:$0xff]
    %v1081 = vld [vmem:[#allocation5 + $0xb0] sm:$0xf]
    %v1082 = vld [vmem:[#allocation5 + $0xd8] sm:$0xff]
    %v1083 = vld [vmem:[#allocation5 + $0xe0] sm:$0xf]
    %v1084 = vld [vmem:[#allocation5 + $0x108] sm:$0xff]
    %v1085 = vld [vmem:[#allocation5 + $0x110] sm:$0xf]
    %v1086 = vld [vmem:[#allocation5 + $0x138] sm:$0xff]
    %v1087 = vld [vmem:[#allocation5 + $0x140] sm:$0xf]
    %v1088 = vld [vmem:[#allocation5 + $0x168] sm:$0xff]
    %v1089 = vld [vmem:[#allocation5 + $0x170] sm:$0xf]
    %v1090 = vld [vmem:[#allocation5 + $0x198] sm:$0xff]
    %v1091 = vld [vmem:[#allocation5 + $0x1a0] sm:$0xf]
    %v1092 = vld [vmem:[#allocation5 + $0x1c8] sm:$0xff]
    %v1093 = vld [vmem:[#allocation5 + $0x1d0] sm:$0xf]
    %v1094 = vld [vmem:[#allocation5 + $0x1f8] sm:$0xff]
    %v1095 = vld [vmem:[#allocation5 + $0x200] sm:$0xf]
    %v1096 = vld [vmem:[#allocation5 + $0x228] sm:$0xff]
    %v1097 = vld [vmem:[#allocation5 + $0x230] sm:$0xf]
    %v1098 = vld [vmem:[#allocation5 + $0x258] sm:$0xff]
    %v1099 = vld [vmem:[#allocation5 + $0x260] sm:$0xf]
    %v1100 = vld [vmem:[#allocation5 + $0x288] sm:$0xff]
    %v1101 = vld [vmem:[#allocation5 + $0x290] sm:$0xf]
    %v1102 = vld [vmem:[#allocation5 + $0x2b8] sm:$0xff]
    %v1103 = vld [vmem:[#allocation5 + $0x2c0] sm:$0xf]
    %v1104 = vld [vmem:[#allocation5 + $0x2e8] sm:$0xff]
    %v1105 = vld [vmem:[#allocation5 + $0x2f0] sm:$0xf]
    %v1106 = vld [vmem:[#allocation5 + $0x24] sm:$0xf]
    %v1107 = vld [vmem:[#allocation5 + $0x54] sm:$0xf]
    %v1108 = vld [vmem:[#allocation5 + $0x84] sm:$0xf]
    %v1109 = vld [vmem:[#allocation5 + $0xb4] sm:$0xf]
    %v1110 = vld [vmem:[#allocation5 + $0xe4] sm:$0xf]
    %v1111 = vld [vmem:[#allocation5 + $0x114] sm:$0xf]
    %v1112 = vld [vmem:[#allocation5 + $0x144] sm:$0xf]
    %v1113 = vld [vmem:[#allocation5 + $0x174] sm:$0xf]
    %v1114 = vld [vmem:[#allocation5 + $0x1a4] sm:$0xf]
    %v1115 = vld [vmem:[#allocation5 + $0x1d4] sm:$0xf]
    %v1116 = vld [vmem:[#allocation5 + $0x204] sm:$0xf]
    %v1117 = vld [vmem:[#allocation5 + $0x234] sm:$0xf]
    %v1118 = vld [vmem:[#allocation5 + $0x264] sm:$0xf]
    %v1119 = vld [vmem:[#allocation5 + $0x294] sm:$0xf]
    %v1120 = vld [vmem:[#allocation5 + $0x2c4] sm:$0xf]
    %v1121 = vld [vmem:[#allocation5 + $0x2f4] sm:$0xf]
    %v1122 = vld [vmem:[#allocation5 + $0x28] sm:$0xff]
    %v1123 = vld [vmem:[#allocation5 + $0x58] sm:$0xff]
    %v1124 = vld [vmem:[#allocation5 + $0x88] sm:$0xff]
    %v1125 = vld [vmem:[#allocation5 + $0xb8] sm:$0xff]
    %v1126 = vld [vmem:[#allocation5 + $0xe8] sm:$0xff]
    %v1127 = vld [vmem:[#allocation5 + $0x118] sm:$0xff]
    %v1128 = vld [vmem:[#allocation5 + $0x148] sm:$0xff]
    %v1129 = vld [vmem:[#allocation5 + $0x178] sm:$0xff]
    %v1130 = vld [vmem:[#allocation5 + $0x1a8] sm:$0xff]
    %v1131 = vld [vmem:[#allocation5 + $0x1d8] sm:$0xff]
    %v1132 = vld [vmem:[#allocation5 + $0x208] sm:$0xff]
    %v1133 = vld [vmem:[#allocation5 + $0x238] sm:$0xff]
    %v1134 = vld [vmem:[#allocation5 + $0x268] sm:$0xff]
    %v1135 = vld [vmem:[#allocation5 + $0x298] sm:$0xff]
    %v1136 = vld [vmem:[#allocation5 + $0x2c8] sm:$0xff]
    %v1137 = vld [vmem:[#allocation5 + $0x2f8] sm:$0xff]
    %v1138 = vld [vmem:[#allocation7 + $0x4] sm:$0xf]
    %v1139 = vld [vmem:[#allocation7 + $0xc] sm:$0xf]
    %v1140 = vld [vmem:[#allocation7 + $0x14] sm:$0xf]
    %v1141 = vld [vmem:[#allocation7 + $0x1c] sm:$0xf]
    %v1142 = vld [vmem:[#allocation7 + $0x24] sm:$0xf]
    %v1143 = vld [vmem:[#allocation7 + $0x2c] sm:$0xf]
    %v1144 = vld [vmem:[#allocation7 + $0x34] sm:$0xf]
    %v1145 = vld [vmem:[#allocation7 + $0x3c] sm:$0xf]
    %v1146 = vld [vmem:[#allocation7 + $0x44] sm:$0xf]
    %v1147 = vld [vmem:[#allocation7 + $0x4c] sm:$0xf]
    %v1148 = vld [vmem:[#allocation7 + $0x54] sm:$0xf]
    %v1149 = vld [vmem:[#allocation7 + $0x5c] sm:$0xf]
    %v1150 = vld [vmem:[#allocation7 + $0x64] sm:$0xf]
    %v1151 = vld [vmem:[#allocation7 + $0x6c] sm:$0xf]
    %v1152 = vld [vmem:[#allocation7 + $0x74] sm:$0xf]
    %v1153 = vld [vmem:[#allocation7 + $0x7c] sm:$0xf]
    %v1154 = vld [vmem:[#allocation7 + $0x84] sm:$0xf]
    %v1155 = vld [vmem:[#allocation7 + $0x8c] sm:$0xf]
    %v1156 = vld [vmem:[#allocation7 + $0x94] sm:$0xf]
    %v1157 = vld [vmem:[#allocation7 + $0x9c] sm:$0xf]
    %v1158 = vld [vmem:[#allocation7 + $0xa4] sm:$0xf]
    %v1159 = vld [vmem:[#allocation7 + $0xac] sm:$0xf]
    %v1160 = vld [vmem:[#allocation7 + $0xb4] sm:$0xf]
    %v1161 = vld [vmem:[#allocation7 + $0xbc] sm:$0xf]
    %v1162 = vld [vmem:[#allocation7 + $0xc4] sm:$0xf]
    %v1163 = vld [vmem:[#allocation7 + $0xcc] sm:$0xf]
    %v1164 = vld [vmem:[#allocation7 + $0xd4] sm:$0xf]
    %v1165 = vld [vmem:[#allocation7 + $0xdc] sm:$0xf]
    %v1166 = vld [vmem:[#allocation7 + $0xe4] sm:$0xf]
    %v1167 = vld [vmem:[#allocation7 + $0xec] sm:$0xf]
    %v1168 = vld [vmem:[#allocation7 + $0xf4] sm:$0xf]
    %v1169 = vld [vmem:[#allocation7 + $0xfc] sm:$0xf]
    %v1170 = vld [vmem:[#allocation8 + $0xb] sm:$0x7]
    %v1171 = vld [vmem:[#allocation8 + $0xe] sm:$0x1]
    %v1172 = vld [vmem:[#allocation8 + $0xf] sm:$0x1]
    %v1173 = vld [vmem:[#allocation8 + $0x10] sm:$0x1]
    %v1174 = vld [vmem:[#allocation8 + $0x11] sm:$0x3]
    %v1175 = vld [vmem:[#allocation8 + $0x13] sm:$0x1]
    %v1176 = vld [vmem:[#allocation8 + $0x14] sm:$0x1]
    %v1177 = vld [vmem:[#allocation8 + $0x15] sm:$0x1]
    %v1178 = vpack.c.bf16 %v1073, %v1072
    %v1180 = vlaneseq
    %v1181 = vshrl.u32 %v1180, 7
    %v1182 = vsub.s32 0, %v1181
    %v1183 = vrot.slane %v1170, %v1182
    %v1184 = vlaneseq
    %v1185 = vshrl.u32 %v1184, 7
    %v1186 = vsub.s32 1, %v1185
    %v1187 = vrot.slane %v1170, %v1186
    %v1188 = vlaneseq
    %v1189 = vshrl.u32 %v1188, 7
    %v1190 = vsub.s32 2, %v1189
    %v1191 = vrot.slane %v1170, %v1190
    %v1227 = vunpack.c.l.b16 %v1074
    %v1228 = vunpack.c.h.b16 %v1074
    %v1229 = vunpack.c.l.b16 %v1075
    %v1230 = vunpack.c.l.b16 %v1076
    %v1231 = vunpack.c.h.b16 %v1076
    %v1232 = vunpack.c.l.b16 %v1077
    %v1233 = vunpack.c.l.b16 %v1078
    %v1234 = vunpack.c.h.b16 %v1078
    %v1235 = vunpack.c.l.b16 %v1079
    %v1236 = vunpack.c.l.b16 %v1080
    %v1237 = vunpack.c.h.b16 %v1080
    %v1238 = vunpack.c.l.b16 %v1081
    %v1239 = vunpack.c.l.b16 %v1082
    %v1240 = vunpack.c.h.b16 %v1082
    %v1241 = vunpack.c.l.b16 %v1083
    %v1242 = vunpack.c.l.b16 %v1084
    %v1243 = vunpack.c.h.b16 %v1084
    %v1244 = vunpack.c.l.b16 %v1085
    %v1245 = vunpack.c.l.b16 %v1086
    %v1246 = vunpack.c.h.b16 %v1086
    %v1247 = vunpack.c.l.b16 %v1087
    %v1248 = vunpack.c.l.b16 %v1088
    %v1249 = vunpack.c.h.b16 %v1088
    %v1250 = vunpack.c.l.b16 %v1089
    %v1251 = vunpack.c.l.b16 %v1090
    %v1252 = vunpack.c.h.b16 %v1090
    %v1253 = vunpack.c.l.b16 %v1091
    %v1254 = vunpack.c.l.b16 %v1092
    %v1255 = vunpack.c.h.b16 %v1092
    %v1256 = vunpack.c.l.b16 %v1093
    %v1257 = vunpack.c.l.b16 %v1094
    %v1258 = vunpack.c.h.b16 %v1094
    %v1259 = vunpack.c.l.b16 %v1095
    %v1260 = vunpack.c.l.b16 %v1096
    %v1261 = vunpack.c.h.b16 %v1096
    %v1262 = vunpack.c.l.b16 %v1097
    %v1263 = vunpack.c.l.b16 %v1098
    %v1264 = vunpack.c.h.b16 %v1098
    %v1265 = vunpack.c.l.b16 %v1099
    %v1266 = vunpack.c.l.b16 %v1100
    %v1267 = vunpack.c.h.b16 %v1100
    %v1268 = vunpack.c.l.b16 %v1101
    %v1269 = vunpack.c.l.b16 %v1102
    %v1270 = vunpack.c.h.b16 %v1102
    %v1271 = vunpack.c.l.b16 %v1103
    %v1272 = vunpack.c.l.b16 %v1104
    %v1273 = vunpack.c.h.b16 %v1104
    %v1274 = vunpack.c.l.b16 %v1105
    %v1275 = vpack.c.b16 %v1230, %v1227
    %v1276 = vpack.c.b16 %v1231, %v1228
    %v1277 = vpack.c.b16 %v1232, %v1229
    %v1278 = vpack.c.b16 %v1236, %v1233
    %v1279 = vpack.c.b16 %v1237, %v1234
    %v1280 = vpack.c.b16 %v1238, %v1235
    %v1281 = vpack.c.b16 %v1242, %v1239
    %v1282 = vpack.c.b16 %v1243, %v1240
    %v1283 = vpack.c.b16 %v1244, %v1241
    %v1284 = vpack.c.b16 %v1248, %v1245
    %v1285 = vpack.c.b16 %v1249, %v1246
    %v1286 = vpack.c.b16 %v1250, %v1247
    %v1287 = vpack.c.b16 %v1254, %v1251
    %v1288 = vpack.c.b16 %v1255, %v1252
    %v1289 = vpack.c.b16 %v1256, %v1253
    %v1290 = vpack.c.b16 %v1260, %v1257
    %v1291 = vpack.c.b16 %v1261, %v1258
    %v1292 = vpack.c.b16 %v1262, %v1259
    %v1293 = vpack.c.b16 %v1266, %v1263
    %v1294 = vpack.c.b16 %v1267, %v1264
    %v1295 = vpack.c.b16 %v1268, %v1265
    %v1296 = vpack.c.b16 %v1272, %v1269
    %v1297 = vpack.c.b16 %v1273, %v1270
    %v1298 = vpack.c.b16 %v1274, %v1271
    %1323 = vmatprep.subr.bf16.mxu0 %v1297
    %1324 = vmatpush1.bf16.msra.mxu0 %v1296
    %1325 = vmatprep.subr.bf16.mxu0 %v1294
    %1326 = vmatpush1.bf16.msra.mxu0 %v1293
    %1327 = vmatprep.subr.bf16.mxu0 %v1291
    %1328 = vmatpush1.bf16.msra.mxu0 %v1290
    %1329 = vmatprep.subr.bf16.mxu0 %v1288
    %1330 = vmatpush1.bf16.msra.mxu0 %v1287
    %1331 = vmatprep.subr.bf16.mxu0 %v1285
    %1332 = vmatpush1.bf16.msra.mxu0 %v1284
    %1333 = vmatprep.subr.bf16.mxu0 %v1282
    %1334 = vmatpush1.bf16.msra.mxu0 %v1281
    %1335 = vmatprep.subr.bf16.mxu0 %v1279
    %1336 = vmatpush1.bf16.msra.mxu0 %v1278
    %1337 = vmatprep.subr.bf16.mxu0 %v1276
    %1338 = vmatpush1.bf16.msra.mxu0 %v1275
    %1339 = vmatprep.subr.bf16.mxu0 0
    %1340 = vmatpush2.bf16.msra.mxu0 0
    %1341 = vmatprep.subr.bf16.mxu0 0
    %1342 = vmatpush2.bf16.msra.mxu0 0
    %1343 = vmatprep.subr.bf16.mxu0 0
    %1344 = vmatpush2.bf16.msra.mxu0 0
    %1345 = vmatprep.subr.bf16.mxu0 0
    %1346 = vmatpush2.bf16.msra.mxu0 0
    %1347 = vmatprep.subr.bf16.mxu0 0
    %1348 = vmatpush2.bf16.msra.mxu0 0
    %1349 = vmatprep.subr.bf16.mxu0 0
    %1350 = vmatpush2.bf16.msra.mxu0 0
    %1351 = vmatprep.subr.bf16.mxu0 0
    %1352 = vmatpush2.bf16.msra.mxu0 0
    %1353 = vmatprep.subr.bf16.mxu0 0
    %1354 = vmatpush2.bf16.msra.mxu0 0
    %1355 = vmatprep.mubr.bf16.mxu0 0
    %1356 = vmatmul.mubr.bf16.gmra.mxu0 %v1178
    %v1357 = vpop.f32.mrf.mxu0
    %v1358 = vadd.f32 %v1183, %v1357
    %v1359 = vpop.f32.mrf.mxu0
    %v1360 = vadd.f32 %v1187, %v1359
    %v1361 = vpop.f32.mrf.mxu0
    %v1362 = vadd.f32 %v1183, %v1361
    %v1363 = vpop.f32.mrf.mxu0
    %v1364 = vadd.f32 %v1187, %v1363
    %1365 = vdwg.mxu0
    %1366 = vmatprep.subr.bf16.mxu0 0
    %1367 = vmatpush1.bf16.msra.mxu0 %v1298
    %1368 = vmatprep.subr.bf16.mxu0 0
    %1369 = vmatpush1.bf16.msra.mxu0 %v1295
    %1370 = vmatprep.subr.bf16.mxu0 0
    %1371 = vmatpush1.bf16.msra.mxu0 %v1292
    %1372 = vmatprep.subr.bf16.mxu0 0
    %1373 = vmatpush1.bf16.msra.mxu0 %v1289
    %1374 = vmatprep.subr.bf16.mxu0 0
    %1375 = vmatpush1.bf16.msra.mxu0 %v1286
    %1376 = vmatprep.subr.bf16.mxu0 0
    %1377 = vmatpush1.bf16.msra.mxu0 %v1283
    %1378 = vmatprep.subr.bf16.mxu0 0
    %1379 = vmatpush1.bf16.msra.mxu0 %v1280
    %1380 = vmatprep.subr.bf16.mxu0 0
    %1381 = vmatpush1.bf16.msra.mxu0 %v1277
    %1382 = vmatprep.subr.bf16.mxu0 0
    %1383 = vmatpush2.bf16.msra.mxu0 0
    %1384 = vmatprep.subr.bf16.mxu0 0
    %1385 = vmatpush2.bf16.msra.mxu0 0
    %1386 = vmatprep.subr.bf16.mxu0 0
    %1387 = vmatpush2.bf16.msra.mxu0 0
    %1388 = vmatprep.subr.bf16.mxu0 0
    %1389 = vmatpush2.bf16.msra.mxu0 0
    %1390 = vmatprep.subr.bf16.mxu0 0
    %1391 = vmatpush2.bf16.msra.mxu0 0
    %1392 = vmatprep.subr.bf16.mxu0 0
    %1393 = vmatpush2.bf16.msra.mxu0 0
    %1394 = vmatprep.subr.bf16.mxu0 0
    %1395 = vmatpush2.bf16.msra.mxu0 0
    %1396 = vmatprep.subr.bf16.mxu0 0
    %1397 = vmatpush2.bf16.msra.mxu0 0
    %1398 = vmatprep.mubr.bf16.mxu0 0
    %1399 = vmatmul.mubr.bf16.gmra.mxu0 %v1178
    %v1400 = vpop.f32.mrf.mxu0
    %v1401 = vadd.f32 %v1191, %v1400
    %v1402 = vpop.f32.mrf.mxu0
    %v1403 = vpop.f32.mrf.mxu0
    %v1404 = vadd.f32 %v1191, %v1403
    %v1405 = vpop.f32.mrf.mxu0
    %1406 = vdwg.mxu0
    %v1407 = vpack.c.bf16 %v1358, %v1358
    %v1408 = vpack.c.bf16 %v1362, %v1362
    %v1409 = vpack.c.bf16 %v1360, %v1360
    %v1410 = vpack.c.bf16 %v1364, %v1364
    %v1411 = vpack.c.bf16 %v1401, %v1401
    %v1412 = vpack.c.bf16 %v1404, %v1404
    %1413 = vmatprep.subr.bf16.mxu0 0
    %1414 = vmatpush1.bf16.xpose.msra.mxu0 0
    %1415 = vmatprep.subr.bf16.mxu0 0
    %1416 = vmatpush1.bf16.xpose.msra.mxu0 0
    %1417 = vmatprep.subr.bf16.mxu0 0
    %1418 = vmatpush1.bf16.xpose.msra.mxu0 0
    %1419 = vmatprep.subr.bf16.mxu0 0
    %1420 = vmatpush1.bf16.xpose.msra.mxu0 0
    %1421 = vmatprep.subr.bf16.mxu0 0
    %1422 = vmatpush1.bf16.xpose.msra.mxu0 0
    %1423 = vmatprep.subr.bf16.mxu0 0
    %1424 = vmatpush1.bf16.xpose.msra.mxu0 0
    %1425 = vmatprep.subr.bf16.mxu0 0
    %1426 = vmatpush1.bf16.xpose.msra.mxu0 0
    %1427 = vmatprep.subr.bf16.mxu0 0
    %1428 = vmatpush1.bf16.xpose.msra.mxu0 %v1409
    %1429 = vmatprep.subr.bf16.mxu0 0
    %1430 = vmatpush2.bf16.xpose.msra.mxu0 0
    %1431 = vmatprep.subr.bf16.mxu0 0
    %1432 = vmatpush2.bf16.xpose.msra.mxu0 0
    %1433 = vmatprep.subr.bf16.mxu0 0
    %1434 = vmatpush2.bf16.xpose.msra.mxu0 0
    %1435 = vmatprep.subr.bf16.mxu0 0
    %1436 = vmatpush2.bf16.xpose.msra.mxu0 0
    %1437 = vmatprep.subr.bf16.mxu0 0
    %1438 = vmatpush2.bf16.xpose.msra.mxu0 0
    %1439 = vmatprep.subr.bf16.mxu0 0
    %1440 = vmatpush2.bf16.xpose.msra.mxu0 0
    %1441 = vmatprep.subr.bf16.mxu0 0
    %1442 = vmatpush2.bf16.xpose.msra.mxu0 0
    %1443 = vmatprep.subr.bf16.mxu0 0
    %1444 = vmatpush2.bf16.xpose.msra.mxu0 0
    %1445 = vmatprep.mubr.bf16.mxu0 0
    %1446 = vmatmul.mubr.bf16.gmra.mxu0 %v1407
    %v1447 = vpop.f32.mrf.mxu0
    %v1448 = vadd.f32 0.0, %v1447
    %v1449 = vpop.f32.mrf.mxu0
    %v1450 = vpop.f32.mrf.mxu0
    %v1451 = vpop.f32.mrf.mxu0
    %1452 = vdwg.mxu0
    %1453 = vmatprep.subr.bf16.mxu0 0
    %1454 = vmatpush1.bf16.xpose.msra.mxu0 0
    %1455 = vmatprep.subr.bf16.mxu0 0
    %1456 = vmatpush1.bf16.xpose.msra.mxu0 0
    %1457 = vmatprep.subr.bf16.mxu0 0
    %1458 = vmatpush1.bf16.xpose.msra.mxu0 0
    %1459 = vmatprep.subr.bf16.mxu0 0
    %1460 = vmatpush1.bf16.xpose.msra.mxu0 0
    %1461 = vmatprep.subr.bf16.mxu0 0
    %1462 = vmatpush1.bf16.xpose.msra.mxu0 0
    %1463 = vmatprep.subr.bf16.mxu0 0
    %1464 = vmatpush1.bf16.xpose.msra.mxu0 0
    %1465 = vmatprep.subr.bf16.mxu0 0
    %1466 = vmatpush1.bf16.xpose.msra.mxu0 0
    %1467 = vmatprep.subr.bf16.mxu0 0
    %1468 = vmatpush1.bf16.xpose.msra.mxu0 %v1410
    %1469 = vmatprep.subr.bf16.mxu0 0
    %1470 = vmatpush2.bf16.xpose.msra.mxu0 0
    %1471 = vmatprep.subr.bf16.mxu0 0
    %1472 = vmatpush2.bf16.xpose.msra.mxu0 0
    %1473 = vmatprep.subr.bf16.mxu0 0
    %1474 = vmatpush2.bf16.xpose.msra.mxu0 0
    %1475 = vmatprep.subr.bf16.mxu0 0
    %1476 = vmatpush2.bf16.xpose.msra.mxu0 0
    %1477 = vmatprep.subr.bf16.mxu0 0
    %1478 = vmatpush2.bf16.xpose.msra.mxu0 0
    %1479 = vmatprep.subr.bf16.mxu0 0
    %1480 = vmatpush2.bf16.xpose.msra.mxu0 0
    %1481 = vmatprep.subr.bf16.mxu0 0
    %1482 = vmatpush2.bf16.xpose.msra.mxu0 0
    %1483 = vmatprep.subr.bf16.mxu0 0
    %1484 = vmatpush2.bf16.xpose.msra.mxu0 0
    %1485 = vmatprep.mubr.bf16.mxu0 0
    %1486 = vmatmul.mubr.bf16.gmra.mxu0 %v1408
    %v1487 = vpop.f32.mrf.mxu0
    %v1488 = vadd.f32 0.0, %v1487
    %v1489 = vpop.f32.mrf.mxu0
    %v1490 = vpop.f32.mrf.mxu0
    %v1491 = vpop.f32.mrf.mxu0
    %1492 = vdwg.mxu0
    %v1493 = vsel %vm495, %v1448, -inf
    %1494 = vmax.xlane.f32.xlu0 %v1493
    %v1495 = vpop.xlane.xlu0 %1494
    %v1496 = vsel %vm495, %v1488, -inf
    %1497 = vmax.xlane.f32.xlu0 %v1496
    %v1498 = vpop.xlane.xlu0 %1497
    %v1499 = vsub.f32 %v1448, %v1495
    %v1500 = vsub.f32 %v1488, %v1498
    %v1501 = vmul.f32 %v1499, 1.442695
    %v1502 = vpow.pop %v1501
    %v1503 = vmul.f32 %v1500, 1.442695
    %v1504 = vpow.pop %v1503
    %v1505 = vsel %vm495, %v1502, 0.0
    %1506 = vadd.xlane.f32.xlu0 %v1505
    %v1507 = vpop.xlane.xlu0 %1506
    %v1508 = vsel %vm495, %v1504, 0.0
    %1509 = vadd.xlane.f32.xlu0 %v1508
    %v1510 = vpop.xlane.xlu0 %1509
    %v1511 = vrcp.pop %v1507
    %v1512 = vrcp.pop %v1510
    %v1513 = vmul.f32 %v1502, %v1511
    %v1514 = vmul.f32 %v1504, %v1512
    %v1515 = vpack.c.bf16 %v1513, %v1513
    %v1516 = vpack.c.bf16 %v1514, %v1514
    %v1518 = vsel %vm495, %v1515, 0
    %v1521 = vsel %vm523, %v1411, 0
    %1523 = vmatprep.subr.bf16.mxu0 0
    %1524 = vmatpush1.bf16.msra.mxu0 0
    %1525 = vmatprep.subr.bf16.mxu0 0
    %1526 = vmatpush1.bf16.msra.mxu0 0
    %1527 = vmatprep.subr.bf16.mxu0 0
    %1528 = vmatpush1.bf16.msra.mxu0 0
    %1529 = vmatprep.subr.bf16.mxu0 0
    %1530 = vmatpush1.bf16.msra.mxu0 0
    %1531 = vmatprep.subr.bf16.mxu0 0
    %1532 = vmatpush1.bf16.msra.mxu0 0
    %1533 = vmatprep.subr.bf16.mxu0 0
    %1534 = vmatpush1.bf16.msra.mxu0 0
    %1535 = vmatprep.subr.bf16.mxu0 0
    %1536 = vmatpush1.bf16.msra.mxu0 0
    %1537 = vmatprep.subr.bf16.mxu0 0
    %1538 = vmatpush1.bf16.msra.mxu0 %v1521
    %1539 = vmatprep.subr.bf16.mxu0 0
    %1540 = vmatpush2.bf16.msra.mxu0 0
    %1541 = vmatprep.subr.bf16.mxu0 0
    %1542 = vmatpush2.bf16.msra.mxu0 0
    %1543 = vmatprep.subr.bf16.mxu0 0
    %1544 = vmatpush2.bf16.msra.mxu0 0
    %1545 = vmatprep.subr.bf16.mxu0 0
    %1546 = vmatpush2.bf16.msra.mxu0 0
    %1547 = vmatprep.subr.bf16.mxu0 0
    %1548 = vmatpush2.bf16.msra.mxu0 0
    %1549 = vmatprep.subr.bf16.mxu0 0
    %1550 = vmatpush2.bf16.msra.mxu0 0
    %1551 = vmatprep.subr.bf16.mxu0 0
    %1552 = vmatpush2.bf16.msra.mxu0 0
    %1553 = vmatprep.subr.bf16.mxu0 0
    %1554 = vmatpush2.bf16.msra.mxu0 0
    %1555 = vmatprep.mubr.bf16.mxu0 0
    %1556 = vmatmul.mubr.bf16.gmra.mxu0 %v1518
    %v1557 = vpop.f32.mrf.mxu0
    %v1558 = vadd.f32 0.0, %v1557
    %v1559 = vpop.f32.mrf.mxu0
    %v1560 = vpop.f32.mrf.mxu0
    %v1561 = vpop.f32.mrf.mxu0
    %1562 = vdwg.mxu0
    %v1564 = vsel %vm495, %v1516, 0
    %v1567 = vsel %vm523, %v1412, 0
    %1569 = vmatprep.subr.bf16.mxu0 0
    %1570 = vmatpush1.bf16.msra.mxu0 0
    %1571 = vmatprep.subr.bf16.mxu0 0
    %1572 = vmatpush1.bf16.msra.mxu0 0
    %1573 = vmatprep.subr.bf16.mxu0 0
    %1574 = vmatpush1.bf16.msra.mxu0 0
    %1575 = vmatprep.subr.bf16.mxu0 0
    %1576 = vmatpush1.bf16.msra.mxu0 0
    %1577 = vmatprep.subr.bf16.mxu0 0
    %1578 = vmatpush1.bf16.msra.mxu0 0
    %1579 = vmatprep.subr.bf16.mxu0 0
    %1580 = vmatpush1.bf16.msra.mxu0 0
    %1581 = vmatprep.subr.bf16.mxu0 0
    %1582 = vmatpush1.bf16.msra.mxu0 0
    %1583 = vmatprep.subr.bf16.mxu0 0
    %1584 = vmatpush1.bf16.msra.mxu0 %v1567
    %1585 = vmatprep.subr.bf16.mxu0 0
    %1586 = vmatpush2.bf16.msra.mxu0 0
    %1587 = vmatprep.subr.bf16.mxu0 0
    %1588 = vmatpush2.bf16.msra.mxu0 0
    %1589 = vmatprep.subr.bf16.mxu0 0
    %1590 = vmatpush2.bf16.msra.mxu0 0
    %1591 = vmatprep.subr.bf16.mxu0 0
    %1592 = vmatpush2.bf16.msra.mxu0 0
    %1593 = vmatprep.subr.bf16.mxu0 0
    %1594 = vmatpush2.bf16.msra.mxu0 0
    %1595 = vmatprep.subr.bf16.mxu0 0
    %1596 = vmatpush2.bf16.msra.mxu0 0
    %1597 = vmatprep.subr.bf16.mxu0 0
    %1598 = vmatpush2.bf16.msra.mxu0 0
    %1599 = vmatprep.subr.bf16.mxu0 0
    %1600 = vmatpush2.bf16.msra.mxu0 0
    %1601 = vmatprep.mubr.bf16.mxu0 0
    %1602 = vmatmul.mubr.bf16.gmra.mxu0 %v1564
    %v1603 = vpop.f32.mrf.mxu0
    %v1604 = vadd.f32 0.0, %v1603
    %v1605 = vpop.f32.mrf.mxu0
    %v1606 = vpop.f32.mrf.mxu0
    %v1607 = vpop.f32.mrf.mxu0
    %1608 = vdwg.mxu0
    %v1609 = vpack.c.bf16 %v1604, %v1558
    %v1611 = vlaneseq
    %v1612 = vshrl.u32 %v1611, 7
    %v1613 = vsub.s32 0, %v1612
    %v1614 = vrot.slane %v1171, %v1613
    %v1632 = vunpack.c.l.b16 %v1106
    %v1633 = vunpack.c.l.b16 %v1107
    %v1634 = vunpack.c.l.b16 %v1108
    %v1635 = vunpack.c.l.b16 %v1109
    %v1636 = vunpack.c.l.b16 %v1110
    %v1637 = vunpack.c.l.b16 %v1111
    %v1638 = vunpack.c.l.b16 %v1112
    %v1639 = vunpack.c.l.b16 %v1113
    %v1640 = vunpack.c.l.b16 %v1114
    %v1641 = vunpack.c.l.b16 %v1115
    %v1642 = vunpack.c.l.b16 %v1116
    %v1643 = vunpack.c.l.b16 %v1117
    %v1644 = vunpack.c.l.b16 %v1118
    %v1645 = vunpack.c.l.b16 %v1119
    %v1646 = vunpack.c.l.b16 %v1120
    %v1647 = vunpack.c.l.b16 %v1121
    %v1648 = vpack.c.b16 %v1633, %v1632
    %v1649 = vpack.c.b16 %v1635, %v1634
    %v1650 = vpack.c.b16 %v1637, %v1636
    %v1651 = vpack.c.b16 %v1639, %v1638
    %v1652 = vpack.c.b16 %v1641, %v1640
    %v1653 = vpack.c.b16 %v1643, %v1642
    %v1654 = vpack.c.b16 %v1645, %v1644
    %v1655 = vpack.c.b16 %v1647, %v1646
    %1664 = vmatprep.subr.bf16.mxu0 0
    %1665 = vmatpush1.bf16.msra.mxu0 %v1655
    %1666 = vmatprep.subr.bf16.mxu0 0
    %1667 = vmatpush1.bf16.msra.mxu0 %v1654
    %1668 = vmatprep.subr.bf16.mxu0 0
    %1669 = vmatpush1.bf16.msra.mxu0 %v1653
    %1670 = vmatprep.subr.bf16.mxu0 0
    %1671 = vmatpush1.bf16.msra.mxu0 %v1652
    %1672 = vmatprep.subr.bf16.mxu0 0
    %1673 = vmatpush1.bf16.msra.mxu0 %v1651
    %1674 = vmatprep.subr.bf16.mxu0 0
    %1675 = vmatpush1.bf16.msra.mxu0 %v1650
    %1676 = vmatprep.subr.bf16.mxu0 0
    %1677 = vmatpush1.bf16.msra.mxu0 %v1649
    %1678 = vmatprep.subr.bf16.mxu0 0
    %1679 = vmatpush1.bf16.msra.mxu0 %v1648
    %1680 = vmatprep.subr.bf16.mxu0 0
    %1681 = vmatpush2.bf16.msra.mxu0 0
    %1682 = vmatprep.subr.bf16.mxu0 0
    %1683 = vmatpush2.bf16.msra.mxu0 0
    %1684 = vmatprep.subr.bf16.mxu0 0
    %1685 = vmatpush2.bf16.msra.mxu0 0
    %1686 = vmatprep.subr.bf16.mxu0 0
    %1687 = vmatpush2.bf16.msra.mxu0 0
    %1688 = vmatprep.subr.bf16.mxu0 0
    %1689 = vmatpush2.bf16.msra.mxu0 0
    %1690 = vmatprep.subr.bf16.mxu0 0
    %1691 = vmatpush2.bf16.msra.mxu0 0
    %1692 = vmatprep.subr.bf16.mxu0 0
    %1693 = vmatpush2.bf16.msra.mxu0 0
    %1694 = vmatprep.subr.bf16.mxu0 0
    %1695 = vmatpush2.bf16.msra.mxu0 0
    %1696 = vmatprep.mubr.bf16.mxu0 0
    %1697 = vmatmul.mubr.bf16.gmra.mxu0 %v1609
    %v1698 = vpop.f32.mrf.mxu0
    %v1699 = vadd.f32 %v1614, %v1698
    %v1700 = vpop.f32.mrf.mxu0
    %v1701 = vpop.f32.mrf.mxu0
    %v1702 = vadd.f32 %v1614, %v1701
    %v1703 = vpop.f32.mrf.mxu0
    %1704 = vdwg.mxu0
    %v1705 = vadd.f32 %v1072, %v1699
    %v1706 = vadd.f32 %v1073, %v1702
    %1707 = vadd.xlane.f32.xlu0 %v1705
    %v1708 = vpop.xlane.xlu0 %1707
    %1709 = vadd.xlane.f32.xlu0 %v1706
    %v1710 = vpop.xlane.xlu0 %1709
    %v1711 = vmul.f32 %v1708, %v715
    %v1712 = vmul.f32 %v1710, %v715
    %v1713 = vsub.f32 %v1705, %v1711
    %v1714 = vsub.f32 %v1706, %v1712
    %v1715 = vmul.f32 %v1713, %v1713
    %v1716 = vmul.f32 %v1714, %v1714
    %1717 = vadd.xlane.f32.xlu0 %v1715
    %v1718 = vpop.xlane.xlu0 %1717
    %1719 = vadd.xlane.f32.xlu0 %v1716
    %v1720 = vpop.xlane.xlu0 %1719
    %v1721 = vmul.f32 %v1718, %v715
    %v1722 = vmul.f32 %v1720, %v715
    %v1723 = vadd.f32 %v1721, 1e-05
    %v1724 = vadd.f32 %v1722, 1e-05
    %v1725 = vrsqrt.pop %v1723
    %v1726 = vrsqrt.pop %v1724
    %v1727 = vmul.f32 %v1713, %v1725
    %v1728 = vmul.f32 %v1714, %v1726
    %v1730 = vlaneseq
    %v1731 = vshrl.u32 %v1730, 7
    %v1732 = vsub.s32 0, %v1731
    %v1733 = vrot.slane %v1172, %v1732
    %v1735 = vmul.f32 %v1727, %v1733
    %v1736 = vmul.f32 %v1728, %v1733
    %v1738 = vlaneseq
    %v1739 = vshrl.u32 %v1738, 7
    %v1740 = vsub.s32 0, %v1739
    %v1741 = vrot.slane %v1173, %v1740
    %v1743 = vadd.f32 %v1735, %v1741
    %v1744 = vadd.f32 %v1736, %v1741
    %v1745 = vpack.c.bf16 %v1744, %v1743
    %v1747 = vlaneseq
    %v1748 = vshrl.u32 %v1747, 7
    %v1749 = vsub.s32 0, %v1748
    %v1750 = vrot.slane %v1174, %v1749
    %v1751 = vlaneseq
    %v1752 = vshrl.u32 %v1751, 7
    %v1753 = vsub.s32 1, %v1752
    %v1754 = vrot.slane %v1174, %v1753
    %v1773 = vunpack.c.l.b16 %v1122
    %v1774 = vunpack.c.h.b16 %v1122
    %v1775 = vunpack.c.l.b16 %v1123
    %v1776 = vunpack.c.h.b16 %v1123
    %v1777 = vunpack.c.l.b16 %v1124
    %v1778 = vunpack.c.h.b16 %v1124
    %v1779 = vunpack.c.l.b16 %v1125
    %v1780 = vunpack.c.h.b16 %v1125
    %v1781 = vunpack.c.l.b16 %v1126
    %v1782 = vunpack.c.h.b16 %v1126
    %v1783 = vunpack.c.l.b16 %v1127
    %v1784 = vunpack.c.h.b16 %v1127
    %v1785 = vunpack.c.l.b16 %v1128
    %v1786 = vunpack.c.h.b16 %v1128
    %v1787 = vunpack.c.l.b16 %v1129
    %v1788 = vunpack.c.h.b16 %v1129
    %v1789 = vunpack.c.l.b16 %v1130
    %v1790 = vunpack.c.h.b16 %v1130
    %v1791 = vunpack.c.l.b16 %v1131
    %v1792 = vunpack.c.h.b16 %v1131
    %v1793 = vunpack.c.l.b16 %v1132
    %v1794 = vunpack.c.h.b16 %v1132
    %v1795 = vunpack.c.l.b16 %v1133
    %v1796 = vunpack.c.h.b16 %v1133
    %v1797 = vunpack.c.l.b16 %v1134
    %v1798 = vunpack.c.h.b16 %v1134
    %v1799 = vunpack.c.l.b16 %v1135
    %v1800 = vunpack.c.h.b16 %v1135
    %v1801 = vunpack.c.l.b16 %v1136
    %v1802 = vunpack.c.h.b16 %v1136
    %v1803 = vunpack.c.l.b16 %v1137
    %v1804 = vunpack.c.h.b16 %v1137
    %v1805 = vpack.c.b16 %v1775, %v1773
    %v1806 = vpack.c.b16 %v1776, %v1774
    %v1807 = vpack.c.b16 %v1779, %v1777
    %v1808 = vpack.c.b16 %v1780, %v1778
    %v1809 = vpack.c.b16 %v1783, %v1781
    %v1810 = vpack.c.b16 %v1784, %v1782
    %v1811 = vpack.c.b16 %v1787, %v1785
    %v1812 = vpack.c.b16 %v1788, %v1786
    %v1813 = vpack.c.b16 %v1791, %v1789
    %v1814 = vpack.c.b16 %v1792, %v1790
    %v1815 = vpack.c.b16 %v1795, %v1793
    %v1816 = vpack.c.b16 %v1796, %v1794
    %v1817 = vpack.c.b16 %v1799, %v1797
    %v1818 = vpack.c.b16 %v1800, %v1798
    %v1819 = vpack.c.b16 %v1803, %v1801
    %v1820 = vpack.c.b16 %v1804, %v1802
    %1837 = vmatprep.subr.bf16.mxu0 %v1820
    %1838 = vmatpush1.bf16.msra.mxu0 %v1819
    %1839 = vmatprep.subr.bf16.mxu0 %v1818
    %1840 = vmatpush1.bf16.msra.mxu0 %v1817
    %1841 = vmatprep.subr.bf16.mxu0 %v1816
    %1842 = vmatpush1.bf16.msra.mxu0 %v1815
    %1843 = vmatprep.subr.bf16.mxu0 %v1814
    %1844 = vmatpush1.bf16.msra.mxu0 %v1813
    %1845 = vmatprep.subr.bf16.mxu0 %v1812
    %1846 = vmatpush1.bf16.msra.mxu0 %v1811
    %1847 = vmatprep.subr.bf16.mxu0 %v1810
    %1848 = vmatpush1.bf16.msra.mxu0 %v1809
    %1849 = vmatprep.subr.bf16.mxu0 %v1808
    %1850 = vmatpush1.bf16.msra.mxu0 %v1807
    %1851 = vmatprep.subr.bf16.mxu0 %v1806
    %1852 = vmatpush1.bf16.msra.mxu0 %v1805
    %1853 = vmatprep.subr.bf16.mxu0 0
    %1854 = vmatpush2.bf16.msra.mxu0 0
    %1855 = vmatprep.subr.bf16.mxu0 0
    %1856 = vmatpush2.bf16.msra.mxu0 0
    %1857 = vmatprep.subr.bf16.mxu0 0
    %1858 = vmatpush2.bf16.msra.mxu0 0
    %1859 = vmatprep.subr.bf16.mxu0 0
    %1860 = vmatpush2.bf16.msra.mxu0 0
    %1861 = vmatprep.subr.bf16.mxu0 0
    %1862 = vmatpush2.bf16.msra.mxu0 0
    %1863 = vmatprep.subr.bf16.mxu0 0
    %1864 = vmatpush2.bf16.msra.mxu0 0
    %1865 = vmatprep.subr.bf16.mxu0 0
    %1866 = vmatpush2.bf16.msra.mxu0 0
    %1867 = vmatprep.subr.bf16.mxu0 0
    %1868 = vmatpush2.bf16.msra.mxu0 0
    %1869 = vmatprep.mubr.bf16.mxu0 0
    %1870 = vmatmul.mubr.bf16.gmra.mxu0 %v1745
    %v1871 = vpop.f32.mrf.mxu0
    %v1872 = vadd.f32 %v1750, %v1871
    %v1873 = vpop.f32.mrf.mxu0
    %v1874 = vadd.f32 %v1754, %v1873
    %v1875 = vpop.f32.mrf.mxu0
    %v1876 = vadd.f32 %v1750, %v1875
    %v1877 = vpop.f32.mrf.mxu0
    %v1878 = vadd.f32 %v1754, %v1877
    %1879 = vdwg.mxu0
    %v1880 = vmax.f32 %v1872, 0.0
    %v1881 = vmax.f32 %v1874, 0.0
    %v1882 = vmax.f32 %v1876, 0.0
    %v1883 = vmax.f32 %v1878, 0.0
    %v1884 = vpack.c.bf16 %v1882, %v1880
    %v1885 = vpack.c.bf16 %v1883, %v1881
    %v1887 = vlaneseq
    %v1888 = vshrl.u32 %v1887, 7
    %v1889 = vsub.s32 0, %v1888
    %v1890 = vrot.slane %v1175, %v1889
    %v1924 = vunpack.c.l.b16 %v1138
    %v1925 = vunpack.c.l.b16 %v1139
    %v1926 = vunpack.c.l.b16 %v1140
    %v1927 = vunpack.c.l.b16 %v1141
    %v1928 = vunpack.c.l.b16 %v1142
    %v1929 = vunpack.c.l.b16 %v1143
    %v1930 = vunpack.c.l.b16 %v1144
    %v1931 = vunpack.c.l.b16 %v1145
    %v1932 = vunpack.c.l.b16 %v1146
    %v1933 = vunpack.c.l.b16 %v1147
    %v1934 = vunpack.c.l.b16 %v1148
    %v1935 = vunpack.c.l.b16 %v1149
    %v1936 = vunpack.c.l.b16 %v1150
    %v1937 = vunpack.c.l.b16 %v1151
    %v1938 = vunpack.c.l.b16 %v1152
    %v1939 = vunpack.c.l.b16 %v1153
    %v1940 = vunpack.c.l.b16 %v1154
    %v1941 = vunpack.c.l.b16 %v1155
    %v1942 = vunpack.c.l.b16 %v1156
    %v1943 = vunpack.c.l.b16 %v1157
    %v1944 = vunpack.c.l.b16 %v1158
    %v1945 = vunpack.c.l.b16 %v1159
    %v1946 = vunpack.c.l.b16 %v1160
    %v1947 = vunpack.c.l.b16 %v1161
    %v1948 = vunpack.c.l.b16 %v1162
    %v1949 = vunpack.c.l.b16 %v1163
    %v1950 = vunpack.c.l.b16 %v1164
    %v1951 = vunpack.c.l.b16 %v1165
    %v1952 = vunpack.c.l.b16 %v1166
    %v1953 = vunpack.c.l.b16 %v1167
    %v1954 = vunpack.c.l.b16 %v1168
    %v1955 = vunpack.c.l.b16 %v1169
    %v1956 = vpack.c.b16 %v1925, %v1924
    %v1957 = vpack.c.b16 %v1927, %v1926
    %v1958 = vpack.c.b16 %v1929, %v1928
    %v1959 = vpack.c.b16 %v1931, %v1930
    %v1960 = vpack.c.b16 %v1933, %v1932
    %v1961 = vpack.c.b16 %v1935, %v1934
    %v1962 = vpack.c.b16 %v1937, %v1936
    %v1963 = vpack.c.b16 %v1939, %v1938
    %v1964 = vpack.c.b16 %v1941, %v1940
    %v1965 = vpack.c.b16 %v1943, %v1942
    %v1966 = vpack.c.b16 %v1945, %v1944
    %v1967 = vpack.c.b16 %v1947, %v1946
    %v1968 = vpack.c.b16 %v1949, %v1948
    %v1969 = vpack.c.b16 %v1951, %v1950
    %v1970 = vpack.c.b16 %v1953, %v1952
    %v1971 = vpack.c.b16 %v1955, %v1954
    %1988 = vmatprep.subr.bf16.mxu0 0
    %1989 = vmatpush1.bf16.msra.mxu0 %v1963
    %1990 = vmatprep.subr.bf16.mxu0 0
    %1991 = vmatpush1.bf16.msra.mxu0 %v1962
    %1992 = vmatprep.subr.bf16.mxu0 0
    %1993 = vmatpush1.bf16.msra.mxu0 %v1961
    %1994 = vmatprep.subr.bf16.mxu0 0
    %1995 = vmatpush1.bf16.msra.mxu0 %v1960
    %1996 = vmatprep.subr.bf16.mxu0 0
    %1997 = vmatpush1.bf16.msra.mxu0 %v1959
    %1998 = vmatprep.subr.bf16.mxu0 0
    %1999 = vmatpush1.bf16.msra.mxu0 %v1958
    %2000 = vmatprep.subr.bf16.mxu0 0
    %2001 = vmatpush1.bf16.msra.mxu0 %v1957
    %2002 = vmatprep.subr.bf16.mxu0 0
    %2003 = vmatpush1.bf16.msra.mxu0 %v1956
    %2004 = vmatprep.subr.bf16.mxu0 0
    %2005 = vmatpush2.bf16.msra.mxu0 %v1971
    %2006 = vmatprep.subr.bf16.mxu0 0
    %2007 = vmatpush2.bf16.msra.mxu0 %v1970
    %2008 = vmatprep.subr.bf16.mxu0 0
    %2009 = vmatpush2.bf16.msra.mxu0 %v1969
    %2010 = vmatprep.subr.bf16.mxu0 0
    %2011 = vmatpush2.bf16.msra.mxu0 %v1968
    %2012 = vmatprep.subr.bf16.mxu0 0
    %2013 = vmatpush2.bf16.msra.mxu0 %v1967
    %2014 = vmatprep.subr.bf16.mxu0 0
    %2015 = vmatpush2.bf16.msra.mxu0 %v1966
    %2016 = vmatprep.subr.bf16.mxu0 0
    %2017 = vmatpush2.bf16.msra.mxu0 %v1965
    %2018 = vmatprep.subr.bf16.mxu0 0
    %2019 = vmatpush2.bf16.msra.mxu0 %v1964
    %2020 = vmatprep.mubr.bf16.mxu0 %v1885
    %2021 = vmatmul.mubr.bf16.gmra.mxu0 %v1884
    %v2022 = vpop.f32.mrf.mxu0
    %v2023 = vadd.f32 %v1890, %v2022
    %v2024 = vpop.f32.mrf.mxu0
    %v2025 = vpop.f32.mrf.mxu0
    %v2026 = vadd.f32 %v1890, %v2025
    %v2027 = vpop.f32.mrf.mxu0
    %2028 = vdwg.mxu0
    %v2029 = vadd.f32 %v1743, %v2023
    %v2030 = vadd.f32 %v1744, %v2026
    %2031 = vadd.xlane.f32.xlu0 %v2029
    %v2032 = vpop.xlane.xlu0 %2031
    %2033 = vadd.xlane.f32.xlu0 %v2030
    %v2034 = vpop.xlane.xlu0 %2033
    %v2035 = vmul.f32 %v2032, %v715
    %v2036 = vmul.f32 %v2034, %v715
    %v2037 = vsub.f32 %v2029, %v2035
    %v2038 = vsub.f32 %v2030, %v2036
    %v2039 = vmul.f32 %v2037, %v2037
    %v2040 = vmul.f32 %v2038, %v2038
    %2041 = vadd.xlane.f32.xlu0 %v2039
    %v2042 = vpop.xlane.xlu0 %2041
    %2043 = vadd.xlane.f32.xlu0 %v2040
    %v2044 = vpop.xlane.xlu0 %2043
    %v2045 = vmul.f32 %v2042, %v715
    %v2046 = vmul.f32 %v2044, %v715
    %v2047 = vadd.f32 %v2045, 1e-05
    %v2048 = vadd.f32 %v2046, 1e-05
    %v2049 = vrsqrt.pop %v2047
    %v2050 = vrsqrt.pop %v2048
    %v2051 = vmul.f32 %v2037, %v2049
    %v2052 = vmul.f32 %v2038, %v2050
    %v2054 = vlaneseq
    %v2055 = vshrl.u32 %v2054, 7
    %v2056 = vsub.s32 0, %v2055
    %v2057 = vrot.slane %v1176, %v2056
    %v2059 = vmul.f32 %v2051, %v2057
    %v2060 = vmul.f32 %v2052, %v2057
    %v2062 = vlaneseq
    %v2063 = vshrl.u32 %v2062, 7
    %v2064 = vsub.s32 0, %v2063
    %v2065 = vrot.slane %v1177, %v2064
    %v2067 = vadd.f32 %v2059, %v2065
    %v2068 = vadd.f32 %v2060, %v2065
    %v2069 = vrot.slane %v2067, 4
    %v2070 = vadd.f32 %v2067, %v2069
    %v2071 = vrot.slane %v2070, 2
    %v2072 = vadd.f32 %v2070, %v2071
    %v2073 = vrot.slane %v2072, 1
    %v2074 = vadd.f32 %v2072, %v2073
    %v2075 = vrot.slane %v2068, 4
    %v2076 = vadd.f32 %v2068, %v2075
    %v2077 = vrot.slane %v2076, 2
    %v2078 = vadd.f32 %v2076, %v2077
    %v2079 = vrot.slane %v2078, 1
    %v2080 = vadd.f32 %v2078, %v2079
    %v2081 = vrcp.pop 8.0
    %v2082 = vmul.f32 %v2074, %v2081
    %v2083 = vmul.f32 %v2080, %v2081
    %v2084 = vld [vmem:[#allocation8 + $0x16] sm:$0x1]
    %v2085 = vld [vmem:[#allocation8 + $0x17] sm:$0x1]
    %vm2088 = vcmask 1041409
    %v2089 = vsel %vm2088, %v2083, %v2082
    %vm2091 = vcmask 1041408
    %v2092 = vsel %vm2091, %v2089, 0.0
    %2093 = vadd.xlane.f32.xlu0 %v2092
    %v2094 = vpop.xlane.xlu0 %2093
    %v2095 = vmul.f32 %v2094, %v715
    %v2097 = vrot.slane %v2095, 1
    %v2100 = vsub.f32 %v2082, %v2095
    %v2101 = vsub.f32 %v2083, %v2097
    %v2102 = vmul.f32 %v2100, %v2100
    %v2103 = vmul.f32 %v2101, %v2101
    %v2106 = vrot.slane %v2103, 7
    %v2107 = vsel %vm2088, %v2106, %v2102
    %v2109 = vsel %vm2091, %v2107, 0.0
    %2110 = vadd.xlane.f32.xlu0 %v2109
    %v2111 = vpop.xlane.xlu0 %2110
    %v2112 = vmul.f32 %v2111, %v715
    %v2113 = vadd.f32 %v2112, 1e-05
    %v2114 = vrsqrt.pop %v2113
    %v2116 = vrot.slane %v2114, 1
    %v2119 = vmul.f32 %v2100, %v2114
    %v2120 = vmul.f32 %v2101, %v2116
    %v2122 = vlaneseq
    %v2123 = vshrl.u32 %v2122, 7
    %v2124 = vsub.s32 0, %v2123
    %v2125 = vrot.slane %v2084, %v2124
    %v2127 = vmul.f32 %v2119, %v2125
    %v2128 = vmul.f32 %v2120, %v2125
    %v2130 = vlaneseq
    %v2131 = vshrl.u32 %v2130, 7
    %v2132 = vsub.s32 0, %v2131
    %v2133 = vrot.slane %v2085, %v2132
    %v2135 = vadd.f32 %v2127, %v2133
    %v2136 = vadd.f32 %v2128, %v2133
    %v2139 = vrot.slane %v2136, 7
    %v2140 = vsel %vm2088, %v2139, %v2135
    %2142 = vst [vmem:[#allocation10] sm:$0x3] %v2140
    // Predicated region
    $region34: #{tpu_custom_call.1} parent=1 // pred_check
      _
    $region35: #{tpu_custom_call.1} parent=1 // pred_check_branch
      %2144 = sbr.rel (0) target = $region37
    $region36: #{tpu_custom_call.1} parent=1 // pred_region
      %s2146 = ssub.s32 32, 32
      %2147 = vsyncadd [#allocation4], %s2146
      %s2149 = sshll.u32 [#allocation10], 4
      %s2150 = int_to_ptr.vmem [resolvable:$true] %s2149
      %2152 = dma.vmem_to_hbm [thread:$0]  %s2150, 32, %s4, [#allocation4]
    $region37: #{tpu_custom_call.1} parent=1 // pred_fallthru
      _
    // Predicated region
    $region38: #{tpu_custom_call.1} parent=1 // pred_check
      _
    $region39: #{tpu_custom_call.1} parent=1 // pred_check_branch
      %2154 = sbr.rel (0) target = $region41
    $region40: #{tpu_custom_call.1} parent=1 // pred_region
      %2155 = dma.done [#allocation4], 32
    $region41: #{tpu_custom_call.1} parent=1 // pred_fallthru
      _
    %2156 = vsyncpa [#allocation3], 1
    %2157 = vsyncpa [#allocation6], 1
    %2158 = vsyncpa [#allocation9], 1
    %2159 = vsyncpa [#allocation4], 1

</llo_original>
